<compile_context>
chip_gen: v7x
topology: tpu7x:2x2x1
jax: 0.10.0
libtpu: 0.0.40
codegen_flags: <defaults>
</compile_context>

<pallas_src>
import functools

import numpy as np
import jax
import jax.numpy as jnp
from jax import lax
from jax.experimental import pallas as pl
from jax.experimental.pallas import tpu as pltpu


# ----------------------------- Pallas kernel --------------------------------
def _gcn_kernel(adj_ref, vec_ref, wblk_ref, wt_ref, b_ref, z_ref):
    """Graphs on lanes.

    adj_ref : (N, N, gb)     adj_ref[n, m, g] = A_norm[g][n, m]
    vec_ref : (N*D, gb)      vec_ref[n*D + d, g] = X[g][n, d]
    wblk_ref: (N*D, N*D)     blockdiag_N(W^T)
    wt_ref  : (D, D)         W^T
    b_ref   : (D, 1)         GraphConv bias
    z_ref   : (D, gb)        x[0] + y[0] per graph (lane-dense output)
    """
    N = adj_ref.shape[0]
    D = wt_ref.shape[0]
    gb = z_ref.shape[1]

    # Layer-1 shared-weight transform for all N nodes of all gb graphs in a
    # single MXU matmul: xw[n*D + e, g] = sum_d W[d, e] * X[g][n, d].
    xw = jnp.dot(wblk_ref[...], vec_ref[...],
                 preferred_element_type=jnp.float32)          # (N*D, gb)

    bias = jnp.broadcast_to(b_ref[...], (D, gb))              # hoisted broadcast

    # Adjacency planes: a[n] is (N, gb); row m is the (1, gb) lane vector of
    # A_norm[·][n, m] coefficients for this block of graphs.
    a = [adj_ref[n] for n in range(N)]

    # Layer-1 aggregation + bias + ReLU: unrolled VPU multiply-accumulate on
    # fully lane-dense (D, gb) tiles (no tiny per-graph MXU matmuls).
    x = []
    for n in range(N):
        acc = a[n][0:1, :] * xw[0:D, :]
        for m in range(1, N):
            acc = acc + a[n][m:m + 1, :] * xw[m * D:(m + 1) * D, :]
        x.append(jnp.maximum(acc + bias, 0.0))                 # (D, gb)

    # Layer 2: only node 0 of the second conv is consumed downstream.
    h2 = a[0][0:1, :] * x[0]
    for m in range(1, N):
        h2 = h2 + a[0][m:m + 1, :] * x[m]
    y0 = jnp.maximum(
        jnp.dot(wt_ref[...], h2, preferred_element_type=jnp.float32) + bias,
        0.0)                                                    # (D, gb)

    # Lane-dense readout tensor z = x[0] + y[0]; the width-2 Linear runs once
    # in the wrapper as a dense (B, D) @ (D, 2).
    z_ref[...] = x[0] + y0


def _cost(ng, N, D):
    nd = N * D
    flops = ng * (2 * nd * nd        # block-diagonal shared-weight matmul
                  + 2 * N * N * D    # layer-1 aggregation
                  + 2 * N * D        # layer-2 row-0 aggregation
                  + 2 * D * D        # layer-2 weight matmul
                  + 4 * N * D)       # bias + ReLU
    bytes_accessed = (ng * (N * N + N * D + D) * 4      # adj + vec + z
                      + (nd * nd + D * D + D) * 4)      # weights / bias
    return pl.CostEstimate(flops=int(flops), transcendentals=0,
                           bytes_accessed=int(bytes_accessed))


def _run_block(adj_t, vec_t, wblk, w_t, b_col, gb, n_blocks):
    """Run the kernel over the first n_blocks*gb graphs of the given arrays."""
    N = adj_t.shape[0]
    D = w_t.shape[0]
    nd = N * D
    ng = gb * n_blocks
    return pl.pallas_call(
        _gcn_kernel,
        out_shape=jax.ShapeDtypeStruct((D, ng), jnp.float32),
        grid_spec=pltpu.PrefetchScalarGridSpec(
            num_scalar_prefetch=0,
            grid=(n_blocks,),
            in_specs=[
                pl.BlockSpec((N, N, gb), lambda i: (0, 0, i)),
                pl.BlockSpec((nd, gb), lambda i: (0, i)),
                pl.BlockSpec((nd, nd), lambda i: (0, 0)),
                pl.BlockSpec((D, D), lambda i: (0, 0)),
                pl.BlockSpec((D, 1), lambda i: (0, 0)),
            ],
            out_specs=pl.BlockSpec((D, gb), lambda i: (0, i)),
        ),
        compiler_params=pltpu.CompilerParams(
            dimension_semantics=("parallel",),
            vmem_limit_bytes=32 * 1024 * 1024),
        cost_estimate=_cost(ng, N, D),
    )(adj_t, vec_t, wblk, w_t, b_col)


# ------------------------------ wrapper --------------------------------------
@functools.partial(jax.jit, static_argnames=("block_graphs",))
def gcn_forward(adj_t, vec_t, w, b, w2, b2, block_graphs=512):
    """adj_t: (N, N, B) f32 normalized adjacency (graphs on the last axis).
       vec_t: (N*D, B) f32 node embeddings, row index = node*D + feature.
       Returns (B, 2) logits."""
    N = adj_t.shape[0]
    B = adj_t.shape[-1]
    D = w.shape[0]

    adj_t = adj_t.astype(jnp.float32)
    vec_t = vec_t.astype(jnp.float32)
    w = w.astype(jnp.float32)
    wblk = jnp.kron(jnp.eye(N, dtype=jnp.float32), w.T)       # blockdiag(W^T)
    w_t = w.T
    b_col = b.astype(jnp.float32).reshape(D, 1)
    w2 = w2.astype(jnp.float32)
    b2 = b2.astype(jnp.float32)

    def readout(z):                                            # (D, ng) -> (ng, 2)
        return z.T @ w2 + b2

    # Small batch: one full-array block (no 128-alignment requirement).
    if B < 2 * 128:
        return readout(_run_block(adj_t, vec_t, wblk, w_t, b_col, B, 1))

    # Large batch: lane-aligned blocks (multiple of 128), >= 2 grid steps so
    # both v7x TensorCores get work, and NO device-side padding: the grid just
    # covers the first n_main graphs of the full arrays.
    target = max(128, (int(block_graphs) // 128) * 128)
    gb = max(128, min(target, (B // 2) // 128 * 128))
    n_blocks = B // gb
    n_main = n_blocks * gb
    outs = [readout(_run_block(adj_t, vec_t, wblk, w_t, b_col, gb, n_blocks))]

    rem = B - n_main
    if rem:
        # Bounded tail (< gb graphs): one full-array block on a small slice.
        adj_tail = lax.slice_in_dim(adj_t, n_main, B, axis=2)
        vec_tail = lax.slice_in_dim(vec_t, n_main, B, axis=1)
        outs.append(readout(
            _run_block(adj_tail, vec_tail, wblk, w_t, b_col, rem, 1)))
    return jnp.concatenate(outs, axis=0)


# ------------------------------- glue (host) --------------------------------
def build_normalized_adjacency(n, bonds):
    """Dense DGL-style 'both'-normalized adjacency A_norm[dst, src].

    Edge set mirrors Model.process():
      - self loop on every node
      - edge (i -> 0) for i in 1..n-1
      - both directions for every bond (u, v)
    Multi-edges accumulate (as DGL message passing would).
    """
    A = np.zeros((n, n), dtype=np.float32)            # A[dst, src]
    for u in range(n):
        A[u, u] += 1.0                                # self loops
    for i in range(1, n):
        A[0, i] += 1.0                                # star into node 0
    for (u, v) in bonds:
        A[v, u] += 1.0
        A[u, v] += 1.0
    deg_out = A.sum(axis=0)                           # per source node
    deg_in = A.sum(axis=1)                            # per dest node
    norm = 1.0 / np.sqrt(np.outer(deg_in, deg_out))
    return (A * norm).astype(np.float32)


def gcn_forward_ref(adj_t, vec_t, w, b, w2, b2):
    """Pure-JAX reference for correctness checking (full 2-layer conv)."""
    N = adj_t.shape[0]
    D = w.shape[0]
    adj = jnp.transpose(adj_t, (2, 0, 1))             # (B, N, N)
    vec = vec_t.T.reshape(-1, N, D)                   # (B, N, D)

    def one(a_g, x0):
        x = jnp.maximum(a_g @ x0 @ w + b, 0.0)
        y = jnp.maximum(a_g @ x @ w + b, 0.0)
        return (x[0] + y[0]) @ w2 + b2

    return jax.vmap(one)(adj, vec)


if __name__ == "__main__":
    N, D = 8, 32                                      # nodes per graph, hidden dim

    key = jax.random.PRNGKey(0)
    k_emb, k_w, k_b, k_w2, k_b2, k_idx, k_idx2 = jax.random.split(key, 7)

    # Deterministic "parameters" (nn.Embedding(500, D), GraphConv W/b, Linear(D,2)).
    embed_table = jax.random.normal(k_emb, (500, D), dtype=jnp.float32) * 0.1
    w = jax.random.normal(k_w, (D, D), dtype=jnp.float32) * 0.1
    bias = jax.random.normal(k_b, (D,), dtype=jnp.float32) * 0.1
    w2 = jax.random.normal(k_w2, (D, 2), dtype=jnp.float32) * 0.1
    b2 = jax.random.normal(k_b2, (2,), dtype=jnp.float32) * 0.1

    # TODO(synk): RDKit SMILES parsing / DGL graph construction and the atom
    # feature integer sums have no Pallas equivalent; node ids are synthesized.
    def make_inputs(nb, idx_key):
        idx = jax.random.randint(idx_key, (nb, N), 0, 500)
        # Embedding lookup emitted directly in the kernel's (N*D, B) layout.
        vec_t = embed_table[idx].reshape(nb, N * D).T          # (N*D, nb)
        adjs = []
        for g in range(nb):
            bonds = [(i, i + 1) for i in range(N - 1)]
            bonds.append((0, 2 + (g % (N - 2))))
            adjs.append(build_normalized_adjacency(N, bonds))
        adj_t = jnp.asarray(np.stack(adjs, axis=-1))           # (N, N, nb)
        return adj_t, vec_t

    # Small-batch path: single full-array block.
    B = 20
    adj_t, vec_t = make_inputs(B, k_idx)
    out = gcn_forward(adj_t, vec_t, w, bias, w2, b2)
    jax.block_until_ready(out)
    ref = gcn_forward_ref(adj_t, vec_t, w, bias, w2, b2)
    assert out.shape == (B, 2)
    assert jnp.allclose(out, ref, atol=1e-4, rtol=1e-4), (out, ref)

    # Large-batch path: multi-step lane-aligned grid (2 x 128 graphs, parallel
    # axis) plus a 44-graph tail call, no input padding.
    B2 = 300
    adj_t2, vec_t2 = make_inputs(B2, k_idx2)
    out2 = gcn_forward(adj_t2, vec_t2, w, bias, w2, b2)
    jax.block_until_ready(out2)
    ref2 = gcn_forward_ref(adj_t2, vec_t2, w, bias, w2, b2)
    assert out2.shape == (B2, 2)
    assert jnp.allclose(out2, ref2, atol=1e-4, rtol=1e-4)

    print("KERNEL_OK")
</pallas_src>

<mosaic_0001>
module attributes {stable_mosaic.version = 11 : i64} {
  func.func @_gcn_kernel(%arg0: i32, %arg1: memref<8x8x20xf32, #tpu.memory_space<vmem>>, %arg2: memref<256x20xf32, #tpu.memory_space<vmem>>, %arg3: memref<256x256xf32, #tpu.memory_space<vmem>>, %arg4: memref<32x32xf32, #tpu.memory_space<vmem>>, %arg5: memref<32x1xf32, #tpu.memory_space<vmem>>, %arg6: memref<32x20xf32, #tpu.memory_space<vmem>>) attributes {dimension_semantics = [#tpu.dimension_semantics<parallel>], iteration_bounds = array<i64: 1>, scalar_prefetch = 0 : i64, scratch_operands = 0 : i64, tpu.core_type = #tpu.core_type<tc>, window_params = [{transform_indices = @transform_0, window_bounds = array<i64: 8, 8, 20>}, {transform_indices = @transform_1, window_bounds = array<i64: 256, 20>}, {pipeline_mode = #tpu.pipeline_mode<synchronous>, transform_indices = @transform_2, window_bounds = array<i64: 256, 256>}, {pipeline_mode = #tpu.pipeline_mode<synchronous>, transform_indices = @transform_3, window_bounds = array<i64: 32, 32>}, {pipeline_mode = #tpu.pipeline_mode<synchronous>, transform_indices = @transform_4, window_bounds = array<i64: 32, 1>}, {transform_indices = @transform_5, window_bounds = array<i64: 32, 20>}]} {
    %c0 = arith.constant 0 : index
    %c0_0 = arith.constant 0 : index
    %0 = vector.load %arg3[%c0, %c0_0] : memref<256x256xf32, #tpu.memory_space<vmem>>, vector<256x256xf32>
    %c0_1 = arith.constant 0 : index
    %c0_2 = arith.constant 0 : index
    %1 = vector.load %arg2[%c0_1, %c0_2] : memref<256x20xf32, #tpu.memory_space<vmem>>, vector<256x20xf32>
    %cst = arith.constant dense<0.000000e+00> : vector<256x20xf32>
    %2 = tpu.matmul %0, %1, %cst {dimension_numbers = #tpu.dot_dimension_numbers<[1], [0], [0], [1], [0, 0, 1, 1], [], []>} : vector<256x256xf32>, vector<256x20xf32>, vector<256x20xf32> -> vector<256x20xf32>
    %c0_3 = arith.constant 0 : index
    %c0_4 = arith.constant 0 : index
    %3 = vector.load %arg5[%c0_3, %c0_4] : memref<32x1xf32, #tpu.memory_space<vmem>>, vector<32x1xf32>
    %4 = vector.shape_cast %3 : vector<32x1xf32> to vector<32x1xf32>
    %5 = vector.broadcast %4 : vector<32x1xf32> to vector<32x20xf32>
    %c0_5 = arith.constant 0 : index
    %c0_6 = arith.constant 0 : index
    %c0_7 = arith.constant 0 : index
    %6 = vector.load %arg1[%c0_5, %c0_6, %c0_7] : memref<8x8x20xf32, #tpu.memory_space<vmem>>, vector<1x8x20xf32>
    %7 = vector.shape_cast %6 : vector<1x8x20xf32> to vector<8x20xf32>
    %c1 = arith.constant 1 : index
    %c0_8 = arith.constant 0 : index
    %c0_9 = arith.constant 0 : index
    %8 = vector.load %arg1[%c1, %c0_8, %c0_9] : memref<8x8x20xf32, #tpu.memory_space<vmem>>, vector<1x8x20xf32>
    %9 = vector.shape_cast %8 : vector<1x8x20xf32> to vector<8x20xf32>
    %c2 = arith.constant 2 : index
    %c0_10 = arith.constant 0 : index
    %c0_11 = arith.constant 0 : index
    %10 = vector.load %arg1[%c2, %c0_10, %c0_11] : memref<8x8x20xf32, #tpu.memory_space<vmem>>, vector<1x8x20xf32>
    %11 = vector.shape_cast %10 : vector<1x8x20xf32> to vector<8x20xf32>
    %c3 = arith.constant 3 : index
    %c0_12 = arith.constant 0 : index
    %c0_13 = arith.constant 0 : index
    %12 = vector.load %arg1[%c3, %c0_12, %c0_13] : memref<8x8x20xf32, #tpu.memory_space<vmem>>, vector<1x8x20xf32>
    %13 = vector.shape_cast %12 : vector<1x8x20xf32> to vector<8x20xf32>
    %c4 = arith.constant 4 : index
    %c0_14 = arith.constant 0 : index
    %c0_15 = arith.constant 0 : index
    %14 = vector.load %arg1[%c4, %c0_14, %c0_15] : memref<8x8x20xf32, #tpu.memory_space<vmem>>, vector<1x8x20xf32>
    %15 = vector.shape_cast %14 : vector<1x8x20xf32> to vector<8x20xf32>
    %c5 = arith.constant 5 : index
    %c0_16 = arith.constant 0 : index
    %c0_17 = arith.constant 0 : index
    %16 = vector.load %arg1[%c5, %c0_16, %c0_17] : memref<8x8x20xf32, #tpu.memory_space<vmem>>, vector<1x8x20xf32>
    %17 = vector.shape_cast %16 : vector<1x8x20xf32> to vector<8x20xf32>
    %c6 = arith.constant 6 : index
    %c0_18 = arith.constant 0 : index
    %c0_19 = arith.constant 0 : index
    %18 = vector.load %arg1[%c6, %c0_18, %c0_19] : memref<8x8x20xf32, #tpu.memory_space<vmem>>, vector<1x8x20xf32>
    %19 = vector.shape_cast %18 : vector<1x8x20xf32> to vector<8x20xf32>
    %c7 = arith.constant 7 : index
    %c0_20 = arith.constant 0 : index
    %c0_21 = arith.constant 0 : index
    %20 = vector.load %arg1[%c7, %c0_20, %c0_21] : memref<8x8x20xf32, #tpu.memory_space<vmem>>, vector<1x8x20xf32>
    %21 = vector.shape_cast %20 : vector<1x8x20xf32> to vector<8x20xf32>
    %22 = vector.extract_strided_slice %7 {offsets = [0, 0], sizes = [1, 20], strides = [1, 1]} : vector<8x20xf32> to vector<1x20xf32>
    %23 = vector.extract_strided_slice %2 {offsets = [0, 0], sizes = [32, 20], strides = [1, 1]} : vector<256x20xf32> to vector<32x20xf32>
    %24 = vector.broadcast %22 : vector<1x20xf32> to vector<32x20xf32>
    %25 = arith.mulf %24, %23 : vector<32x20xf32>
    %26 = vector.extract_strided_slice %7 {offsets = [1, 0], sizes = [1, 20], strides = [1, 1]} : vector<8x20xf32> to vector<1x20xf32>
    %27 = vector.extract_strided_slice %2 {offsets = [32, 0], sizes = [32, 20], strides = [1, 1]} : vector<256x20xf32> to vector<32x20xf32>
    %28 = vector.broadcast %26 : vector<1x20xf32> to vector<32x20xf32>
    %29 = arith.mulf %28, %27 : vector<32x20xf32>
    %30 = arith.addf %25, %29 : vector<32x20xf32>
    %31 = vector.extract_strided_slice %7 {offsets = [2, 0], sizes = [1, 20], strides = [1, 1]} : vector<8x20xf32> to vector<1x20xf32>
    %32 = vector.extract_strided_slice %2 {offsets = [64, 0], sizes = [32, 20], strides = [1, 1]} : vector<256x20xf32> to vector<32x20xf32>
    %33 = vector.broadcast %31 : vector<1x20xf32> to vector<32x20xf32>
    %34 = arith.mulf %33, %32 : vector<32x20xf32>
    %35 = arith.addf %30, %34 : vector<32x20xf32>
    %36 = vector.extract_strided_slice %7 {offsets = [3, 0], sizes = [1, 20], strides = [1, 1]} : vector<8x20xf32> to vector<1x20xf32>
    %37 = vector.extract_strided_slice %2 {offsets = [96, 0], sizes = [32, 20], strides = [1, 1]} : vector<256x20xf32> to vector<32x20xf32>
    %38 = vector.broadcast %36 : vector<1x20xf32> to vector<32x20xf32>
    %39 = arith.mulf %38, %37 : vector<32x20xf32>
    %40 = arith.addf %35, %39 : vector<32x20xf32>
    %41 = vector.extract_strided_slice %7 {offsets = [4, 0], sizes = [1, 20], strides = [1, 1]} : vector<8x20xf32> to vector<1x20xf32>
    %42 = vector.extract_strided_slice %2 {offsets = [128, 0], sizes = [32, 20], strides = [1, 1]} : vector<256x20xf32> to vector<32x20xf32>
    %43 = vector.broadcast %41 : vector<1x20xf32> to vector<32x20xf32>
    %44 = arith.mulf %43, %42 : vector<32x20xf32>
    %45 = arith.addf %40, %44 : vector<32x20xf32>
    %46 = vector.extract_strided_slice %7 {offsets = [5, 0], sizes = [1, 20], strides = [1, 1]} : vector<8x20xf32> to vector<1x20xf32>
    %47 = vector.extract_strided_slice %2 {offsets = [160, 0], sizes = [32, 20], strides = [1, 1]} : vector<256x20xf32> to vector<32x20xf32>
    %48 = vector.broadcast %46 : vector<1x20xf32> to vector<32x20xf32>
    %49 = arith.mulf %48, %47 : vector<32x20xf32>
    %50 = arith.addf %45, %49 : vector<32x20xf32>
    %51 = vector.extract_strided_slice %7 {offsets = [6, 0], sizes = [1, 20], strides = [1, 1]} : vector<8x20xf32> to vector<1x20xf32>
    %52 = vector.extract_strided_slice %2 {offsets = [192, 0], sizes = [32, 20], strides = [1, 1]} : vector<256x20xf32> to vector<32x20xf32>
    %53 = vector.broadcast %51 : vector<1x20xf32> to vector<32x20xf32>
    %54 = arith.mulf %53, %52 : vector<32x20xf32>
    %55 = arith.addf %50, %54 : vector<32x20xf32>
    %56 = vector.extract_strided_slice %7 {offsets = [7, 0], sizes = [1, 20], strides = [1, 1]} : vector<8x20xf32> to vector<1x20xf32>
    %57 = vector.extract_strided_slice %2 {offsets = [224, 0], sizes = [32, 20], strides = [1, 1]} : vector<256x20xf32> to vector<32x20xf32>
    %58 = vector.broadcast %56 : vector<1x20xf32> to vector<32x20xf32>
    %59 = arith.mulf %58, %57 : vector<32x20xf32>
    %60 = arith.addf %55, %59 : vector<32x20xf32>
    %61 = arith.addf %60, %5 : vector<32x20xf32>
    %cst_22 = arith.constant 0.000000e+00 : f32
    %62 = vector.broadcast %cst_22 : f32 to vector<32x20xf32>
    %63 = arith.maximumf %61, %62 : vector<32x20xf32>
    %64 = vector.extract_strided_slice %9 {offsets = [0, 0], sizes = [1, 20], strides = [1, 1]} : vector<8x20xf32> to vector<1x20xf32>
    %65 = vector.extract_strided_slice %2 {offsets = [0, 0], sizes = [32, 20], strides = [1, 1]} : vector<256x20xf32> to vector<32x20xf32>
    %66 = vector.broadcast %64 : vector<1x20xf32> to vector<32x20xf32>
    %67 = arith.mulf %66, %65 : vector<32x20xf32>
    %68 = vector.extract_strided_slice %9 {offsets = [1, 0], sizes = [1, 20], strides = [1, 1]} : vector<8x20xf32> to vector<1x20xf32>
    %69 = vector.extract_strided_slice %2 {offsets = [32, 0], sizes = [32, 20], strides = [1, 1]} : vector<256x20xf32> to vector<32x20xf32>
    %70 = vector.broadcast %68 : vector<1x20xf32> to vector<32x20xf32>
    %71 = arith.mulf %70, %69 : vector<32x20xf32>
    %72 = arith.addf %67, %71 : vector<32x20xf32>
    %73 = vector.extract_strided_slice %9 {offsets = [2, 0], sizes = [1, 20], strides = [1, 1]} : vector<8x20xf32> to vector<1x20xf32>
    %74 = vector.extract_strided_slice %2 {offsets = [64, 0], sizes = [32, 20], strides = [1, 1]} : vector<256x20xf32> to vector<32x20xf32>
    %75 = vector.broadcast %73 : vector<1x20xf32> to vector<32x20xf32>
    %76 = arith.mulf %75, %74 : vector<32x20xf32>
    %77 = arith.addf %72, %76 : vector<32x20xf32>
    %78 = vector.extract_strided_slice %9 {offsets = [3, 0], sizes = [1, 20], strides = [1, 1]} : vector<8x20xf32> to vector<1x20xf32>
    %79 = vector.extract_strided_slice %2 {offsets = [96, 0], sizes = [32, 20], strides = [1, 1]} : vector<256x20xf32> to vector<32x20xf32>
    %80 = vector.broadcast %78 : vector<1x20xf32> to vector<32x20xf32>
    %81 = arith.mulf %80, %79 : vector<32x20xf32>
    %82 = arith.addf %77, %81 : vector<32x20xf32>
    %83 = vector.extract_strided_slice %9 {offsets = [4, 0], sizes = [1, 20], strides = [1, 1]} : vector<8x20xf32> to vector<1x20xf32>
    %84 = vector.extract_strided_slice %2 {offsets = [128, 0], sizes = [32, 20], strides = [1, 1]} : vector<256x20xf32> to vector<32x20xf32>
    %85 = vector.broadcast %83 : vector<1x20xf32> to vector<32x20xf32>
    %86 = arith.mulf %85, %84 : vector<32x20xf32>
    %87 = arith.addf %82, %86 : vector<32x20xf32>
    %88 = vector.extract_strided_slice %9 {offsets = [5, 0], sizes = [1, 20], strides = [1, 1]} : vector<8x20xf32> to vector<1x20xf32>
    %89 = vector.extract_strided_slice %2 {offsets = [160, 0], sizes = [32, 20], strides = [1, 1]} : vector<256x20xf32> to vector<32x20xf32>
    %90 = vector.broadcast %88 : vector<1x20xf32> to vector<32x20xf32>
    %91 = arith.mulf %90, %89 : vector<32x20xf32>
    %92 = arith.addf %87, %91 : vector<32x20xf32>
    %93 = vector.extract_strided_slice %9 {offsets = [6, 0], sizes = [1, 20], strides = [1, 1]} : vector<8x20xf32> to vector<1x20xf32>
    %94 = vector.extract_strided_slice %2 {offsets = [192, 0], sizes = [32, 20], strides = [1, 1]} : vector<256x20xf32> to vector<32x20xf32>
    %95 = vector.broadcast %93 : vector<1x20xf32> to vector<32x20xf32>
    %96 = arith.mulf %95, %94 : vector<32x20xf32>
    %97 = arith.addf %92, %96 : vector<32x20xf32>
    %98 = vector.extract_strided_slice %9 {offsets = [7, 0], sizes = [1, 20], strides = [1, 1]} : vector<8x20xf32> to vector<1x20xf32>
    %99 = vector.extract_strided_slice %2 {offsets = [224, 0], sizes = [32, 20], strides = [1, 1]} : vector<256x20xf32> to vector<32x20xf32>
    %100 = vector.broadcast %98 : vector<1x20xf32> to vector<32x20xf32>
    %101 = arith.mulf %100, %99 : vector<32x20xf32>
    %102 = arith.addf %97, %101 : vector<32x20xf32>
    %103 = arith.addf %102, %5 : vector<32x20xf32>
    %cst_23 = arith.constant 0.000000e+00 : f32
    %104 = vector.broadcast %cst_23 : f32 to vector<32x20xf32>
    %105 = arith.maximumf %103, %104 : vector<32x20xf32>
    %106 = vector.extract_strided_slice %11 {offsets = [0, 0], sizes = [1, 20], strides = [1, 1]} : vector<8x20xf32> to vector<1x20xf32>
    %107 = vector.extract_strided_slice %2 {offsets = [0, 0], sizes = [32, 20], strides = [1, 1]} : vector<256x20xf32> to vector<32x20xf32>
    %108 = vector.broadcast %106 : vector<1x20xf32> to vector<32x20xf32>
    %109 = arith.mulf %108, %107 : vector<32x20xf32>
    %110 = vector.extract_strided_slice %11 {offsets = [1, 0], sizes = [1, 20], strides = [1, 1]} : vector<8x20xf32> to vector<1x20xf32>
    %111 = vector.extract_strided_slice %2 {offsets = [32, 0], sizes = [32, 20], strides = [1, 1]} : vector<256x20xf32> to vector<32x20xf32>
    %112 = vector.broadcast %110 : vector<1x20xf32> to vector<32x20xf32>
    %113 = arith.mulf %112, %111 : vector<32x20xf32>
    %114 = arith.addf %109, %113 : vector<32x20xf32>
    %115 = vector.extract_strided_slice %11 {offsets = [2, 0], sizes = [1, 20], strides = [1, 1]} : vector<8x20xf32> to vector<1x20xf32>
    %116 = vector.extract_strided_slice %2 {offsets = [64, 0], sizes = [32, 20], strides = [1, 1]} : vector<256x20xf32> to vector<32x20xf32>
    %117 = vector.broadcast %115 : vector<1x20xf32> to vector<32x20xf32>
    %118 = arith.mulf %117, %116 : vector<32x20xf32>
    %119 = arith.addf %114, %118 : vector<32x20xf32>
    %120 = vector.extract_strided_slice %11 {offsets = [3, 0], sizes = [1, 20], strides = [1, 1]} : vector<8x20xf32> to vector<1x20xf32>
    %121 = vector.extract_strided_slice %2 {offsets = [96, 0], sizes = [32, 20], strides = [1, 1]} : vector<256x20xf32> to vector<32x20xf32>
    %122 = vector.broadcast %120 : vector<1x20xf32> to vector<32x20xf32>
    %123 = arith.mulf %122, %121 : vector<32x20xf32>
    %124 = arith.addf %119, %123 : vector<32x20xf32>
    %125 = vector.extract_strided_slice %11 {offsets = [4, 0], sizes = [1, 20], strides = [1, 1]} : vector<8x20xf32> to vector<1x20xf32>
    %126 = vector.extract_strided_slice %2 {offsets = [128, 0], sizes = [32, 20], strides = [1, 1]} : vector<256x20xf32> to vector<32x20xf32>
    %127 = vector.broadcast %125 : vector<1x20xf32> to vector<32x20xf32>
    %128 = arith.mulf %127, %126 : vector<32x20xf32>
    %129 = arith.addf %124, %128 : vector<32x20xf32>
    %130 = vector.extract_strided_slice %11 {offsets = [5, 0], sizes = [1, 20], strides = [1, 1]} : vector<8x20xf32> to vector<1x20xf32>
    %131 = vector.extract_strided_slice %2 {offsets = [160, 0], sizes = [32, 20], strides = [1, 1]} : vector<256x20xf32> to vector<32x20xf32>
    %132 = vector.broadcast %130 : vector<1x20xf32> to vector<32x20xf32>
    %133 = arith.mulf %132, %131 : vector<32x20xf32>
    %134 = arith.addf %129, %133 : vector<32x20xf32>
    %135 = vector.extract_strided_slice %11 {offsets = [6, 0], sizes = [1, 20], strides = [1, 1]} : vector<8x20xf32> to vector<1x20xf32>
    %136 = vector.extract_strided_slice %2 {offsets = [192, 0], sizes = [32, 20], strides = [1, 1]} : vector<256x20xf32> to vector<32x20xf32>
    %137 = vector.broadcast %135 : vector<1x20xf32> to vector<32x20xf32>
    %138 = arith.mulf %137, %136 : vector<32x20xf32>
    %139 = arith.addf %134, %138 : vector<32x20xf32>
    %140 = vector.extract_strided_slice %11 {offsets = [7, 0], sizes = [1, 20], strides = [1, 1]} : vector<8x20xf32> to vector<1x20xf32>
    %141 = vector.extract_strided_slice %2 {offsets = [224, 0], sizes = [32, 20], strides = [1, 1]} : vector<256x20xf32> to vector<32x20xf32>
    %142 = vector.broadcast %140 : vector<1x20xf32> to vector<32x20xf32>
    %143 = arith.mulf %142, %141 : vector<32x20xf32>
    %144 = arith.addf %139, %143 : vector<32x20xf32>
    %145 = arith.addf %144, %5 : vector<32x20xf32>
    %cst_24 = arith.constant 0.000000e+00 : f32
    %146 = vector.broadcast %cst_24 : f32 to vector<32x20xf32>
    %147 = arith.maximumf %145, %146 : vector<32x20xf32>
    %148 = vector.extract_strided_slice %13 {offsets = [0, 0], sizes = [1, 20], strides = [1, 1]} : vector<8x20xf32> to vector<1x20xf32>
    %149 = vector.extract_strided_slice %2 {offsets = [0, 0], sizes = [32, 20], strides = [1, 1]} : vector<256x20xf32> to vector<32x20xf32>
    %150 = vector.broadcast %148 : vector<1x20xf32> to vector<32x20xf32>
    %151 = arith.mulf %150, %149 : vector<32x20xf32>
    %152 = vector.extract_strided_slice %13 {offsets = [1, 0], sizes = [1, 20], strides = [1, 1]} : vector<8x20xf32> to vector<1x20xf32>
    %153 = vector.extract_strided_slice %2 {offsets = [32, 0], sizes = [32, 20], strides = [1, 1]} : vector<256x20xf32> to vector<32x20xf32>
    %154 = vector.broadcast %152 : vector<1x20xf32> to vector<32x20xf32>
    %155 = arith.mulf %154, %153 : vector<32x20xf32>
    %156 = arith.addf %151, %155 : vector<32x20xf32>
    %157 = vector.extract_strided_slice %13 {offsets = [2, 0], sizes = [1, 20], strides = [1, 1]} : vector<8x20xf32> to vector<1x20xf32>
    %158 = vector.extract_strided_slice %2 {offsets = [64, 0], sizes = [32, 20], strides = [1, 1]} : vector<256x20xf32> to vector<32x20xf32>
    %159 = vector.broadcast %157 : vector<1x20xf32> to vector<32x20xf32>
    %160 = arith.mulf %159, %158 : vector<32x20xf32>
    %161 = arith.addf %156, %160 : vector<32x20xf32>
    %162 = vector.extract_strided_slice %13 {offsets = [3, 0], sizes = [1, 20], strides = [1, 1]} : vector<8x20xf32> to vector<1x20xf32>
    %163 = vector.extract_strided_slice %2 {offsets = [96, 0], sizes = [32, 20], strides = [1, 1]} : vector<256x20xf32> to vector<32x20xf32>
    %164 = vector.broadcast %162 : vector<1x20xf32> to vector<32x20xf32>
    %165 = arith.mulf %164, %163 : vector<32x20xf32>
    %166 = arith.addf %161, %165 : vector<32x20xf32>
    %167 = vector.extract_strided_slice %13 {offsets = [4, 0], sizes = [1, 20], strides = [1, 1]} : vector<8x20xf32> to vector<1x20xf32>
    %168 = vector.extract_strided_slice %2 {offsets = [128, 0], sizes = [32, 20], strides = [1, 1]} : vector<256x20xf32> to vector<32x20xf32>
    %169 = vector.broadcast %167 : vector<1x20xf32> to vector<32x20xf32>
    %170 = arith.mulf %169, %168 : vector<32x20xf32>
    %171 = arith.addf %166, %170 : vector<32x20xf32>
    %172 = vector.extract_strided_slice %13 {offsets = [5, 0], sizes = [1, 20], strides = [1, 1]} : vector<8x20xf32> to vector<1x20xf32>
    %173 = vector.extract_strided_slice %2 {offsets = [160, 0], sizes = [32, 20], strides = [1, 1]} : vector<256x20xf32> to vector<32x20xf32>
    %174 = vector.broadcast %172 : vector<1x20xf32> to vector<32x20xf32>
    %175 = arith.mulf %174, %173 : vector<32x20xf32>
    %176 = arith.addf %171, %175 : vector<32x20xf32>
    %177 = vector.extract_strided_slice %13 {offsets = [6, 0], sizes = [1, 20], strides = [1, 1]} : vector<8x20xf32> to vector<1x20xf32>
    %178 = vector.extract_strided_slice %2 {offsets = [192, 0], sizes = [32, 20], strides = [1, 1]} : vector<256x20xf32> to vector<32x20xf32>
    %179 = vector.broadcast %177 : vector<1x20xf32> to vector<32x20xf32>
    %180 = arith.mulf %179, %178 : vector<32x20xf32>
    %181 = arith.addf %176, %180 : vector<32x20xf32>
    %182 = vector.extract_strided_slice %13 {offsets = [7, 0], sizes = [1, 20], strides = [1, 1]} : vector<8x20xf32> to vector<1x20xf32>
    %183 = vector.extract_strided_slice %2 {offsets = [224, 0], sizes = [32, 20], strides = [1, 1]} : vector<256x20xf32> to vector<32x20xf32>
    %184 = vector.broadcast %182 : vector<1x20xf32> to vector<32x20xf32>
    %185 = arith.mulf %184, %183 : vector<32x20xf32>
    %186 = arith.addf %181, %185 : vector<32x20xf32>
    %187 = arith.addf %186, %5 : vector<32x20xf32>
    %cst_25 = arith.constant 0.000000e+00 : f32
    %188 = vector.broadcast %cst_25 : f32 to vector<32x20xf32>
    %189 = arith.maximumf %187, %188 : vector<32x20xf32>
    %190 = vector.extract_strided_slice %15 {offsets = [0, 0], sizes = [1, 20], strides = [1, 1]} : vector<8x20xf32> to vector<1x20xf32>
    %191 = vector.extract_strided_slice %2 {offsets = [0, 0], sizes = [32, 20], strides = [1, 1]} : vector<256x20xf32> to vector<32x20xf32>
    %192 = vector.broadcast %190 : vector<1x20xf32> to vector<32x20xf32>
    %193 = arith.mulf %192, %191 : vector<32x20xf32>
    %194 = vector.extract_strided_slice %15 {offsets = [1, 0], sizes = [1, 20], strides = [1, 1]} : vector<8x20xf32> to vector<1x20xf32>
    %195 = vector.extract_strided_slice %2 {offsets = [32, 0], sizes = [32, 20], strides = [1, 1]} : vector<256x20xf32> to vector<32x20xf32>
    %196 = vector.broadcast %194 : vector<1x20xf32> to vector<32x20xf32>
    %197 = arith.mulf %196, %195 : vector<32x20xf32>
    %198 = arith.addf %193, %197 : vector<32x20xf32>
    %199 = vector.extract_strided_slice %15 {offsets = [2, 0], sizes = [1, 20], strides = [1, 1]} : vector<8x20xf32> to vector<1x20xf32>
    %200 = vector.extract_strided_slice %2 {offsets = [64, 0], sizes = [32, 20], strides = [1, 1]} : vector<256x20xf32> to vector<32x20xf32>
    %201 = vector.broadcast %199 : vector<1x20xf32> to vector<32x20xf32>
    %202 = arith.mulf %201, %200 : vector<32x20xf32>
    %203 = arith.addf %198, %202 : vector<32x20xf32>
    %204 = vector.extract_strided_slice %15 {offsets = [3, 0], sizes = [1, 20], strides = [1, 1]} : vector<8x20xf32> to vector<1x20xf32>
    %205 = vector.extract_strided_slice %2 {offsets = [96, 0], sizes = [32, 20], strides = [1, 1]} : vector<256x20xf32> to vector<32x20xf32>
    %206 = vector.broadcast %204 : vector<1x20xf32> to vector<32x20xf32>
    %207 = arith.mulf %206, %205 : vector<32x20xf32>
    %208 = arith.addf %203, %207 : vector<32x20xf32>
    %209 = vector.extract_strided_slice %15 {offsets = [4, 0], sizes = [1, 20], strides = [1, 1]} : vector<8x20xf32> to vector<1x20xf32>
    %210 = vector.extract_strided_slice %2 {offsets = [128, 0], sizes = [32, 20], strides = [1, 1]} : vector<256x20xf32> to vector<32x20xf32>
    %211 = vector.broadcast %209 : vector<1x20xf32> to vector<32x20xf32>
    %212 = arith.mulf %211, %210 : vector<32x20xf32>
    %213 = arith.addf %208, %212 : vector<32x20xf32>
    %214 = vector.extract_strided_slice %15 {offsets = [5, 0], sizes = [1, 20], strides = [1, 1]} : vector<8x20xf32> to vector<1x20xf32>
    %215 = vector.extract_strided_slice %2 {offsets = [160, 0], sizes = [32, 20], strides = [1, 1]} : vector<256x20xf32> to vector<32x20xf32>
    %216 = vector.broadcast %214 : vector<1x20xf32> to vector<32x20xf32>
    %217 = arith.mulf %216, %215 : vector<32x20xf32>
    %218 = arith.addf %213, %217 : vector<32x20xf32>
    %219 = vector.extract_strided_slice %15 {offsets = [6, 0], sizes = [1, 20], strides = [1, 1]} : vector<8x20xf32> to vector<1x20xf32>
    %220 = vector.extract_strided_slice %2 {offsets = [192, 0], sizes = [32, 20], strides = [1, 1]} : vector<256x20xf32> to vector<32x20xf32>
    %221 = vector.broadcast %219 : vector<1x20xf32> to vector<32x20xf32>
    %222 = arith.mulf %221, %220 : vector<32x20xf32>
    %223 = arith.addf %218, %222 : vector<32x20xf32>
    %224 = vector.extract_strided_slice %15 {offsets = [7, 0], sizes = [1, 20], strides = [1, 1]} : vector<8x20xf32> to vector<1x20xf32>
    %225 = vector.extract_strided_slice %2 {offsets = [224, 0], sizes = [32, 20], strides = [1, 1]} : vector<256x20xf32> to vector<32x20xf32>
    %226 = vector.broadcast %224 : vector<1x20xf32> to vector<32x20xf32>
    %227 = arith.mulf %226, %225 : vector<32x20xf32>
    %228 = arith.addf %223, %227 : vector<32x20xf32>
    %229 = arith.addf %228, %5 : vector<32x20xf32>
    %cst_26 = arith.constant 0.000000e+00 : f32
    %230 = vector.broadcast %cst_26 : f32 to vector<32x20xf32>
    %231 = arith.maximumf %229, %230 : vector<32x20xf32>
    %232 = vector.extract_strided_slice %17 {offsets = [0, 0], sizes = [1, 20], strides = [1, 1]} : vector<8x20xf32> to vector<1x20xf32>
    %233 = vector.extract_strided_slice %2 {offsets = [0, 0], sizes = [32, 20], strides = [1, 1]} : vector<256x20xf32> to vector<32x20xf32>
    %234 = vector.broadcast %232 : vector<1x20xf32> to vector<32x20xf32>
    %235 = arith.mulf %234, %233 : vector<32x20xf32>
    %236 = vector.extract_strided_slice %17 {offsets = [1, 0], sizes = [1, 20], strides = [1, 1]} : vector<8x20xf32> to vector<1x20xf32>
    %237 = vector.extract_strided_slice %2 {offsets = [32, 0], sizes = [32, 20], strides = [1, 1]} : vector<256x20xf32> to vector<32x20xf32>
    %238 = vector.broadcast %236 : vector<1x20xf32> to vector<32x20xf32>
    %239 = arith.mulf %238, %237 : vector<32x20xf32>
    %240 = arith.addf %235, %239 : vector<32x20xf32>
    %241 = vector.extract_strided_slice %17 {offsets = [2, 0], sizes = [1, 20], strides = [1, 1]} : vector<8x20xf32> to vector<1x20xf32>
    %242 = vector.extract_strided_slice %2 {offsets = [64, 0], sizes = [32, 20], strides = [1, 1]} : vector<256x20xf32> to vector<32x20xf32>
    %243 = vector.broadcast %241 : vector<1x20xf32> to vector<32x20xf32>
    %244 = arith.mulf %243, %242 : vector<32x20xf32>
    %245 = arith.addf %240, %244 : vector<32x20xf32>
    %246 = vector.extract_strided_slice %17 {offsets = [3, 0], sizes = [1, 20], strides = [1, 1]} : vector<8x20xf32> to vector<1x20xf32>
    %247 = vector.extract_strided_slice %2 {offsets = [96, 0], sizes = [32, 20], strides = [1, 1]} : vector<256x20xf32> to vector<32x20xf32>
    %248 = vector.broadcast %246 : vector<1x20xf32> to vector<32x20xf32>
    %249 = arith.mulf %248, %247 : vector<32x20xf32>
    %250 = arith.addf %245, %249 : vector<32x20xf32>
    %251 = vector.extract_strided_slice %17 {offsets = [4, 0], sizes = [1, 20], strides = [1, 1]} : vector<8x20xf32> to vector<1x20xf32>
    %252 = vector.extract_strided_slice %2 {offsets = [128, 0], sizes = [32, 20], strides = [1, 1]} : vector<256x20xf32> to vector<32x20xf32>
    %253 = vector.broadcast %251 : vector<1x20xf32> to vector<32x20xf32>
    %254 = arith.mulf %253, %252 : vector<32x20xf32>
    %255 = arith.addf %250, %254 : vector<32x20xf32>
    %256 = vector.extract_strided_slice %17 {offsets = [5, 0], sizes = [1, 20], strides = [1, 1]} : vector<8x20xf32> to vector<1x20xf32>
    %257 = vector.extract_strided_slice %2 {offsets = [160, 0], sizes = [32, 20], strides = [1, 1]} : vector<256x20xf32> to vector<32x20xf32>
    %258 = vector.broadcast %256 : vector<1x20xf32> to vector<32x20xf32>
    %259 = arith.mulf %258, %257 : vector<32x20xf32>
    %260 = arith.addf %255, %259 : vector<32x20xf32>
    %261 = vector.extract_strided_slice %17 {offsets = [6, 0], sizes = [1, 20], strides = [1, 1]} : vector<8x20xf32> to vector<1x20xf32>
    %262 = vector.extract_strided_slice %2 {offsets = [192, 0], sizes = [32, 20], strides = [1, 1]} : vector<256x20xf32> to vector<32x20xf32>
    %263 = vector.broadcast %261 : vector<1x20xf32> to vector<32x20xf32>
    %264 = arith.mulf %263, %262 : vector<32x20xf32>
    %265 = arith.addf %260, %264 : vector<32x20xf32>
    %266 = vector.extract_strided_slice %17 {offsets = [7, 0], sizes = [1, 20], strides = [1, 1]} : vector<8x20xf32> to vector<1x20xf32>
    %267 = vector.extract_strided_slice %2 {offsets = [224, 0], sizes = [32, 20], strides = [1, 1]} : vector<256x20xf32> to vector<32x20xf32>
    %268 = vector.broadcast %266 : vector<1x20xf32> to vector<32x20xf32>
    %269 = arith.mulf %268, %267 : vector<32x20xf32>
    %270 = arith.addf %265, %269 : vector<32x20xf32>
    %271 = arith.addf %270, %5 : vector<32x20xf32>
    %cst_27 = arith.constant 0.000000e+00 : f32
    %272 = vector.broadcast %cst_27 : f32 to vector<32x20xf32>
    %273 = arith.maximumf %271, %272 : vector<32x20xf32>
    %274 = vector.extract_strided_slice %19 {offsets = [0, 0], sizes = [1, 20], strides = [1, 1]} : vector<8x20xf32> to vector<1x20xf32>
    %275 = vector.extract_strided_slice %2 {offsets = [0, 0], sizes = [32, 20], strides = [1, 1]} : vector<256x20xf32> to vector<32x20xf32>
    %276 = vector.broadcast %274 : vector<1x20xf32> to vector<32x20xf32>
    %277 = arith.mulf %276, %275 : vector<32x20xf32>
    %278 = vector.extract_strided_slice %19 {offsets = [1, 0], sizes = [1, 20], strides = [1, 1]} : vector<8x20xf32> to vector<1x20xf32>
    %279 = vector.extract_strided_slice %2 {offsets = [32, 0], sizes = [32, 20], strides = [1, 1]} : vector<256x20xf32> to vector<32x20xf32>
    %280 = vector.broadcast %278 : vector<1x20xf32> to vector<32x20xf32>
    %281 = arith.mulf %280, %279 : vector<32x20xf32>
    %282 = arith.addf %277, %281 : vector<32x20xf32>
    %283 = vector.extract_strided_slice %19 {offsets = [2, 0], sizes = [1, 20], strides = [1, 1]} : vector<8x20xf32> to vector<1x20xf32>
    %284 = vector.extract_strided_slice %2 {offsets = [64, 0], sizes = [32, 20], strides = [1, 1]} : vector<256x20xf32> to vector<32x20xf32>
    %285 = vector.broadcast %283 : vector<1x20xf32> to vector<32x20xf32>
    %286 = arith.mulf %285, %284 : vector<32x20xf32>
    %287 = arith.addf %282, %286 : vector<32x20xf32>
    %288 = vector.extract_strided_slice %19 {offsets = [3, 0], sizes = [1, 20], strides = [1, 1]} : vector<8x20xf32> to vector<1x20xf32>
    %289 = vector.extract_strided_slice %2 {offsets = [96, 0], sizes = [32, 20], strides = [1, 1]} : vector<256x20xf32> to vector<32x20xf32>
    %290 = vector.broadcast %288 : vector<1x20xf32> to vector<32x20xf32>
    %291 = arith.mulf %290, %289 : vector<32x20xf32>
    %292 = arith.addf %287, %291 : vector<32x20xf32>
    %293 = vector.extract_strided_slice %19 {offsets = [4, 0], sizes = [1, 20], strides = [1, 1]} : vector<8x20xf32> to vector<1x20xf32>
    %294 = vector.extract_strided_slice %2 {offsets = [128, 0], sizes = [32, 20], strides = [1, 1]} : vector<256x20xf32> to vector<32x20xf32>
    %295 = vector.broadcast %293 : vector<1x20xf32> to vector<32x20xf32>
    %296 = arith.mulf %295, %294 : vector<32x20xf32>
    %297 = arith.addf %292, %296 : vector<32x20xf32>
    %298 = vector.extract_strided_slice %19 {offsets = [5, 0], sizes = [1, 20], strides = [1, 1]} : vector<8x20xf32> to vector<1x20xf32>
    %299 = vector.extract_strided_slice %2 {offsets = [160, 0], sizes = [32, 20], strides = [1, 1]} : vector<256x20xf32> to vector<32x20xf32>
    %300 = vector.broadcast %298 : vector<1x20xf32> to vector<32x20xf32>
    %301 = arith.mulf %300, %299 : vector<32x20xf32>
    %302 = arith.addf %297, %301 : vector<32x20xf32>
    %303 = vector.extract_strided_slice %19 {offsets = [6, 0], sizes = [1, 20], strides = [1, 1]} : vector<8x20xf32> to vector<1x20xf32>
    %304 = vector.extract_strided_slice %2 {offsets = [192, 0], sizes = [32, 20], strides = [1, 1]} : vector<256x20xf32> to vector<32x20xf32>
    %305 = vector.broadcast %303 : vector<1x20xf32> to vector<32x20xf32>
    %306 = arith.mulf %305, %304 : vector<32x20xf32>
    %307 = arith.addf %302, %306 : vector<32x20xf32>
    %308 = vector.extract_strided_slice %19 {offsets = [7, 0], sizes = [1, 20], strides = [1, 1]} : vector<8x20xf32> to vector<1x20xf32>
    %309 = vector.extract_strided_slice %2 {offsets = [224, 0], sizes = [32, 20], strides = [1, 1]} : vector<256x20xf32> to vector<32x20xf32>
    %310 = vector.broadcast %308 : vector<1x20xf32> to vector<32x20xf32>
    %311 = arith.mulf %310, %309 : vector<32x20xf32>
    %312 = arith.addf %307, %311 : vector<32x20xf32>
    %313 = arith.addf %312, %5 : vector<32x20xf32>
    %cst_28 = arith.constant 0.000000e+00 : f32
    %314 = vector.broadcast %cst_28 : f32 to vector<32x20xf32>
    %315 = arith.maximumf %313, %314 : vector<32x20xf32>
    %316 = vector.extract_strided_slice %21 {offsets = [0, 0], sizes = [1, 20], strides = [1, 1]} : vector<8x20xf32> to vector<1x20xf32>
    %317 = vector.extract_strided_slice %2 {offsets = [0, 0], sizes = [32, 20], strides = [1, 1]} : vector<256x20xf32> to vector<32x20xf32>
    %318 = vector.broadcast %316 : vector<1x20xf32> to vector<32x20xf32>
    %319 = arith.mulf %318, %317 : vector<32x20xf32>
    %320 = vector.extract_strided_slice %21 {offsets = [1, 0], sizes = [1, 20], strides = [1, 1]} : vector<8x20xf32> to vector<1x20xf32>
    %321 = vector.extract_strided_slice %2 {offsets = [32, 0], sizes = [32, 20], strides = [1, 1]} : vector<256x20xf32> to vector<32x20xf32>
    %322 = vector.broadcast %320 : vector<1x20xf32> to vector<32x20xf32>
    %323 = arith.mulf %322, %321 : vector<32x20xf32>
    %324 = arith.addf %319, %323 : vector<32x20xf32>
    %325 = vector.extract_strided_slice %21 {offsets = [2, 0], sizes = [1, 20], strides = [1, 1]} : vector<8x20xf32> to vector<1x20xf32>
    %326 = vector.extract_strided_slice %2 {offsets = [64, 0], sizes = [32, 20], strides = [1, 1]} : vector<256x20xf32> to vector<32x20xf32>
    %327 = vector.broadcast %325 : vector<1x20xf32> to vector<32x20xf32>
    %328 = arith.mulf %327, %326 : vector<32x20xf32>
    %329 = arith.addf %324, %328 : vector<32x20xf32>
    %330 = vector.extract_strided_slice %21 {offsets = [3, 0], sizes = [1, 20], strides = [1, 1]} : vector<8x20xf32> to vector<1x20xf32>
    %331 = vector.extract_strided_slice %2 {offsets = [96, 0], sizes = [32, 20], strides = [1, 1]} : vector<256x20xf32> to vector<32x20xf32>
    %332 = vector.broadcast %330 : vector<1x20xf32> to vector<32x20xf32>
    %333 = arith.mulf %332, %331 : vector<32x20xf32>
    %334 = arith.addf %329, %333 : vector<32x20xf32>
    %335 = vector.extract_strided_slice %21 {offsets = [4, 0], sizes = [1, 20], strides = [1, 1]} : vector<8x20xf32> to vector<1x20xf32>
    %336 = vector.extract_strided_slice %2 {offsets = [128, 0], sizes = [32, 20], strides = [1, 1]} : vector<256x20xf32> to vector<32x20xf32>
    %337 = vector.broadcast %335 : vector<1x20xf32> to vector<32x20xf32>
    %338 = arith.mulf %337, %336 : vector<32x20xf32>
    %339 = arith.addf %334, %338 : vector<32x20xf32>
    %340 = vector.extract_strided_slice %21 {offsets = [5, 0], sizes = [1, 20], strides = [1, 1]} : vector<8x20xf32> to vector<1x20xf32>
    %341 = vector.extract_strided_slice %2 {offsets = [160, 0], sizes = [32, 20], strides = [1, 1]} : vector<256x20xf32> to vector<32x20xf32>
    %342 = vector.broadcast %340 : vector<1x20xf32> to vector<32x20xf32>
    %343 = arith.mulf %342, %341 : vector<32x20xf32>
    %344 = arith.addf %339, %343 : vector<32x20xf32>
    %345 = vector.extract_strided_slice %21 {offsets = [6, 0], sizes = [1, 20], strides = [1, 1]} : vector<8x20xf32> to vector<1x20xf32>
    %346 = vector.extract_strided_slice %2 {offsets = [192, 0], sizes = [32, 20], strides = [1, 1]} : vector<256x20xf32> to vector<32x20xf32>
    %347 = vector.broadcast %345 : vector<1x20xf32> to vector<32x20xf32>
    %348 = arith.mulf %347, %346 : vector<32x20xf32>
    %349 = arith.addf %344, %348 : vector<32x20xf32>
    %350 = vector.extract_strided_slice %21 {offsets = [7, 0], sizes = [1, 20], strides = [1, 1]} : vector<8x20xf32> to vector<1x20xf32>
    %351 = vector.extract_strided_slice %2 {offsets = [224, 0], sizes = [32, 20], strides = [1, 1]} : vector<256x20xf32> to vector<32x20xf32>
    %352 = vector.broadcast %350 : vector<1x20xf32> to vector<32x20xf32>
    %353 = arith.mulf %352, %351 : vector<32x20xf32>
    %354 = arith.addf %349, %353 : vector<32x20xf32>
    %355 = arith.addf %354, %5 : vector<32x20xf32>
    %cst_29 = arith.constant 0.000000e+00 : f32
    %356 = vector.broadcast %cst_29 : f32 to vector<32x20xf32>
    %357 = arith.maximumf %355, %356 : vector<32x20xf32>
    %358 = vector.extract_strided_slice %7 {offsets = [0, 0], sizes = [1, 20], strides = [1, 1]} : vector<8x20xf32> to vector<1x20xf32>
    %359 = vector.broadcast %358 : vector<1x20xf32> to vector<32x20xf32>
    %360 = arith.mulf %359, %63 : vector<32x20xf32>
    %361 = vector.extract_strided_slice %7 {offsets = [1, 0], sizes = [1, 20], strides = [1, 1]} : vector<8x20xf32> to vector<1x20xf32>
    %362 = vector.broadcast %361 : vector<1x20xf32> to vector<32x20xf32>
    %363 = arith.mulf %362, %105 : vector<32x20xf32>
    %364 = arith.addf %360, %363 : vector<32x20xf32>
    %365 = vector.extract_strided_slice %7 {offsets = [2, 0], sizes = [1, 20], strides = [1, 1]} : vector<8x20xf32> to vector<1x20xf32>
    %366 = vector.broadcast %365 : vector<1x20xf32> to vector<32x20xf32>
    %367 = arith.mulf %366, %147 : vector<32x20xf32>
    %368 = arith.addf %364, %367 : vector<32x20xf32>
    %369 = vector.extract_strided_slice %7 {offsets = [3, 0], sizes = [1, 20], strides = [1, 1]} : vector<8x20xf32> to vector<1x20xf32>
    %370 = vector.broadcast %369 : vector<1x20xf32> to vector<32x20xf32>
    %371 = arith.mulf %370, %189 : vector<32x20xf32>
    %372 = arith.addf %368, %371 : vector<32x20xf32>
    %373 = vector.extract_strided_slice %7 {offsets = [4, 0], sizes = [1, 20], strides = [1, 1]} : vector<8x20xf32> to vector<1x20xf32>
    %374 = vector.broadcast %373 : vector<1x20xf32> to vector<32x20xf32>
    %375 = arith.mulf %374, %231 : vector<32x20xf32>
    %376 = arith.addf %372, %375 : vector<32x20xf32>
    %377 = vector.extract_strided_slice %7 {offsets = [5, 0], sizes = [1, 20], strides = [1, 1]} : vector<8x20xf32> to vector<1x20xf32>
    %378 = vector.broadcast %377 : vector<1x20xf32> to vector<32x20xf32>
    %379 = arith.mulf %378, %273 : vector<32x20xf32>
    %380 = arith.addf %376, %379 : vector<32x20xf32>
    %381 = vector.extract_strided_slice %7 {offsets = [6, 0], sizes = [1, 20], strides = [1, 1]} : vector<8x20xf32> to vector<1x20xf32>
    %382 = vector.broadcast %381 : vector<1x20xf32> to vector<32x20xf32>
    %383 = arith.mulf %382, %315 : vector<32x20xf32>
    %384 = arith.addf %380, %383 : vector<32x20xf32>
    %385 = vector.extract_strided_slice %7 {offsets = [7, 0], sizes = [1, 20], strides = [1, 1]} : vector<8x20xf32> to vector<1x20xf32>
    %386 = vector.broadcast %385 : vector<1x20xf32> to vector<32x20xf32>
    %387 = arith.mulf %386, %357 : vector<32x20xf32>
    %388 = arith.addf %384, %387 : vector<32x20xf32>
    %c0_30 = arith.constant 0 : index
    %c0_31 = arith.constant 0 : index
    %389 = vector.load %arg4[%c0_30, %c0_31] : memref<32x32xf32, #tpu.memory_space<vmem>>, vector<32x32xf32>
    %cst_32 = arith.constant dense<0.000000e+00> : vector<32x20xf32>
    %390 = tpu.matmul %389, %388, %cst_32 {dimension_numbers = #tpu.dot_dimension_numbers<[1], [0], [0], [1], [0, 0, 1, 1], [], []>} : vector<32x32xf32>, vector<32x20xf32>, vector<32x20xf32> -> vector<32x20xf32>
    %391 = arith.addf %390, %5 : vector<32x20xf32>
    %cst_33 = arith.constant 0.000000e+00 : f32
    %392 = vector.broadcast %cst_33 : f32 to vector<32x20xf32>
    %393 = arith.maximumf %391, %392 : vector<32x20xf32>
    %394 = arith.addf %63, %393 : vector<32x20xf32>
    %c0_34 = arith.constant 0 : index
    %c0_35 = arith.constant 0 : index
    %395 = vector.load %arg6[%c0_34, %c0_35] : memref<32x20xf32, #tpu.memory_space<vmem>>, vector<32x20xf32>
    tpu.vector_store %arg6[%c0_34, %c0_35], %394 {strides = array<i32>} : memref<32x20xf32, #tpu.memory_space<vmem>>, vector<32x20xf32>,
    return
  }
  func.func @transform_0(%arg0: i32) -> (i32, i32, i32) {
    %c0_i32 = arith.constant 0 : i32
    %c0_i32_0 = arith.constant 0 : i32
    %c0_i32_1 = arith.constant 0 : i32
    return %c0_i32, %c0_i32_0, %arg0 : i32, i32, i32
  }
  func.func @transform_1(%arg0: i32) -> (i32, i32) {
    %c0_i32 = arith.constant 0 : i32
    %c0_i32_0 = arith.constant 0 : i32
    return %c0_i32, %arg0 : i32, i32
  }
  func.func @transform_2(%arg0: i32) -> (i32, i32) {
    %c0_i32 = arith.constant 0 : i32
    %c0_i32_0 = arith.constant 0 : i32
    %c0_i32_1 = arith.constant 0 : i32
    return %c0_i32, %c0_i32_0 : i32, i32
  }
  func.func @transform_3(%arg0: i32) -> (i32, i32) {
    %c0_i32 = arith.constant 0 : i32
    %c0_i32_0 = arith.constant 0 : i32
    %c0_i32_1 = arith.constant 0 : i32
    return %c0_i32, %c0_i32_0 : i32, i32
  }
  func.func @transform_4(%arg0: i32) -> (i32, i32) {
    %c0_i32 = arith.constant 0 : i32
    %c0_i32_0 = arith.constant 0 : i32
    %c0_i32_1 = arith.constant 0 : i32
    return %c0_i32, %c0_i32_0 : i32, i32
  }
  func.func @transform_5(%arg0: i32) -> (i32, i32) {
    %c0_i32 = arith.constant 0 : i32
    %c0_i32_0 = arith.constant 0 : i32
    return %c0_i32, %arg0 : i32, i32
  }
}

</mosaic_0001>

<llo_original>
// kernel: gcn_forward.1
$region0: #{gcn_forward.1}
  #allocation0 [shape = 'u32[]', space=smem, size = 0x4, offset = 0x4, fixed_abs, tag = 'smem constant byte address 0x4 - core index']
  #allocation1 [shape = 'u32[144,128]{1,0:T(1,128)}', space=vmem, size = 0x12000, scoped, tag = 'internal scratch']
  %s0 = inlined_call_operand.vmem [shape: f32[8,8,20], index: 0, kind: input, shape index: {}]
  %s1 = inlined_call_operand.vmem [shape: f32[256,20], index: 1, kind: input, shape index: {}]
  %s2 = inlined_call_operand.vmem [shape: f32[256,256], index: 2, kind: input, shape index: {}]
  %s3 = inlined_call_operand.vmem [shape: f32[32,32], index: 3, kind: input, shape index: {}]
  %s4 = inlined_call_operand.vmem [shape: f32[32,1], index: 4, kind: input, shape index: {}]
  %s5 = inlined_call_operand.vmem [shape: f32[32,20], index: 5, kind: output, shape index: {}]
  %s6 = sld [smem:[#allocation0]]
  $region30: #{gcn_forward.1} parent=0
    _
  %s8 = ssub.s32 1, %s6
  %s9 = scalar_select 0, %s8, %s6
  // Predicated region
  $region2: #{gcn_forward.1} parent=0 // pred_check
    _
  $region3: #{gcn_forward.1} parent=0 // pred_check_branch
    %11 = sbr.rel (0) target = $region5
  $region4: #{gcn_forward.1} parent=0 // pred_region
    _
  $region5: #{gcn_forward.1} parent=0 // pred_fallthru
    _
  // Predicated region
  $region6: #{gcn_forward.1} parent=0 // pred_check
    _
  $region7: #{gcn_forward.1} parent=0 // pred_check_branch
    %13 = sbr.rel (0) target = $region9
  $region8: #{gcn_forward.1} parent=0 // pred_region
    _
  $region9: #{gcn_forward.1} parent=0 // pred_fallthru
    _
  // Predicated region
  $region10: #{gcn_forward.1} parent=0 // pred_check
    _
  $region11: #{gcn_forward.1} parent=0 // pred_check_branch
    %15 = sbr.rel (0) target = $region13
  $region12: #{gcn_forward.1} parent=0 // pred_region
    _
  $region13: #{gcn_forward.1} parent=0 // pred_fallthru
    _
  // Predicated region
  $region14: #{gcn_forward.1} parent=0 // pred_check
    _
  $region15: #{gcn_forward.1} parent=0 // pred_check_branch
    %17 = sbr.rel (0) target = $region17
  $region16: #{gcn_forward.1} parent=0 // pred_region
    _
  $region17: #{gcn_forward.1} parent=0 // pred_fallthru
    _
  // Predicated region
  $region18: #{gcn_forward.1} parent=0 // pred_check
    _
  $region19: #{gcn_forward.1} parent=0 // pred_check_branch
    %19 = sbr.rel (0) target = $region21
  $region20: #{gcn_forward.1} parent=0 // pred_region
    _
  $region21: #{gcn_forward.1} parent=0 // pred_fallthru
    _
  %v20 = vld [vmem:[%s2] sm:$0xff]
  %v21 = vld [vmem:[%s2 + $0x8] sm:$0xff]
  %v22 = vld [vmem:[%s2 + $0x10] sm:$0xff]
  %v23 = vld [vmem:[%s2 + $0x18] sm:$0xff]
  %v24 = vld [vmem:[%s2 + $0x20] sm:$0xff]
  %v25 = vld [vmem:[%s2 + $0x28] sm:$0xff]
  %v26 = vld [vmem:[%s2 + $0x30] sm:$0xff]
  %v27 = vld [vmem:[%s2 + $0x38] sm:$0xff]
  %v28 = vld [vmem:[%s2 + $0x40] sm:$0xff]
  %v29 = vld [vmem:[%s2 + $0x48] sm:$0xff]
  %v30 = vld [vmem:[%s2 + $0x50] sm:$0xff]
  %v31 = vld [vmem:[%s2 + $0x58] sm:$0xff]
  %v32 = vld [vmem:[%s2 + $0x60] sm:$0xff]
  %v33 = vld [vmem:[%s2 + $0x68] sm:$0xff]
  %v34 = vld [vmem:[%s2 + $0x70] sm:$0xff]
  %v35 = vld [vmem:[%s2 + $0x78] sm:$0xff]
  %v36 = vld [vmem:[%s2 + $0x80] sm:$0xff]
  %v37 = vld [vmem:[%s2 + $0x88] sm:$0xff]
  %v38 = vld [vmem:[%s2 + $0x90] sm:$0xff]
  %v39 = vld [vmem:[%s2 + $0x98] sm:$0xff]
  %v40 = vld [vmem:[%s2 + $0xa0] sm:$0xff]
  %v41 = vld [vmem:[%s2 + $0xa8] sm:$0xff]
  %v42 = vld [vmem:[%s2 + $0xb0] sm:$0xff]
  %v43 = vld [vmem:[%s2 + $0xb8] sm:$0xff]
  %v44 = vld [vmem:[%s2 + $0xc0] sm:$0xff]
  %v45 = vld [vmem:[%s2 + $0xc8] sm:$0xff]
  %v46 = vld [vmem:[%s2 + $0xd0] sm:$0xff]
  %v47 = vld [vmem:[%s2 + $0xd8] sm:$0xff]
  %v48 = vld [vmem:[%s2 + $0xe0] sm:$0xff]
  %v49 = vld [vmem:[%s2 + $0xe8] sm:$0xff]
  %v50 = vld [vmem:[%s2 + $0xf0] sm:$0xff]
  %v51 = vld [vmem:[%s2 + $0xf8] sm:$0xff]
  %v52 = vld [vmem:[%s2 + $0x100] sm:$0xff]
  %v53 = vld [vmem:[%s2 + $0x108] sm:$0xff]
  %v54 = vld [vmem:[%s2 + $0x110] sm:$0xff]
  %v55 = vld [vmem:[%s2 + $0x118] sm:$0xff]
  %v56 = vld [vmem:[%s2 + $0x120] sm:$0xff]
  %v57 = vld [vmem:[%s2 + $0x128] sm:$0xff]
  %v58 = vld [vmem:[%s2 + $0x130] sm:$0xff]
  %v59 = vld [vmem:[%s2 + $0x138] sm:$0xff]
  %v60 = vld [vmem:[%s2 + $0x140] sm:$0xff]
  %v61 = vld [vmem:[%s2 + $0x148] sm:$0xff]
  %v62 = vld [vmem:[%s2 + $0x150] sm:$0xff]
  %v63 = vld [vmem:[%s2 + $0x158] sm:$0xff]
  %v64 = vld [vmem:[%s2 + $0x160] sm:$0xff]
  %v65 = vld [vmem:[%s2 + $0x168] sm:$0xff]
  %v66 = vld [vmem:[%s2 + $0x170] sm:$0xff]
  %v67 = vld [vmem:[%s2 + $0x178] sm:$0xff]
  %v68 = vld [vmem:[%s2 + $0x180] sm:$0xff]
  %v69 = vld [vmem:[%s2 + $0x188] sm:$0xff]
  %v70 = vld [vmem:[%s2 + $0x190] sm:$0xff]
  %v71 = vld [vmem:[%s2 + $0x198] sm:$0xff]
  %v72 = vld [vmem:[%s2 + $0x1a0] sm:$0xff]
  %v73 = vld [vmem:[%s2 + $0x1a8] sm:$0xff]
  %v74 = vld [vmem:[%s2 + $0x1b0] sm:$0xff]
  %v75 = vld [vmem:[%s2 + $0x1b8] sm:$0xff]
  %v76 = vld [vmem:[%s2 + $0x1c0] sm:$0xff]
  %v77 = vld [vmem:[%s2 + $0x1c8] sm:$0xff]
  %v78 = vld [vmem:[%s2 + $0x1d0] sm:$0xff]
  %v79 = vld [vmem:[%s2 + $0x1d8] sm:$0xff]
  %v80 = vld [vmem:[%s2 + $0x1e0] sm:$0xff]
  %v81 = vld [vmem:[%s2 + $0x1e8] sm:$0xff]
  %v82 = vld [vmem:[%s2 + $0x1f0] sm:$0xff]
  %v83 = vld [vmem:[%s2 + $0x1f8] sm:$0xff]
  %v84 = vld [vmem:[%s1] sm:$0xff]
  %v85 = vld [vmem:[%s1 + $0x8] sm:$0xff]
  %v86 = vld [vmem:[%s1 + $0x10] sm:$0xff]
  %v87 = vld [vmem:[%s1 + $0x18] sm:$0xff]
  %v88 = vld [vmem:[%s1 + $0x20] sm:$0xff]
  %v89 = vld [vmem:[%s1 + $0x28] sm:$0xff]
  %v90 = vld [vmem:[%s1 + $0x30] sm:$0xff]
  %v91 = vld [vmem:[%s1 + $0x38] sm:$0xff]
  %v92 = vld [vmem:[%s1 + $0x40] sm:$0xff]
  %v93 = vld [vmem:[%s1 + $0x48] sm:$0xff]
  %v94 = vld [vmem:[%s1 + $0x50] sm:$0xff]
  %v95 = vld [vmem:[%s1 + $0x58] sm:$0xff]
  %v96 = vld [vmem:[%s1 + $0x60] sm:$0xff]
  %v97 = vld [vmem:[%s1 + $0x68] sm:$0xff]
  %v98 = vld [vmem:[%s1 + $0x70] sm:$0xff]
  %v99 = vld [vmem:[%s1 + $0x78] sm:$0xff]
  %v100 = vld [vmem:[%s1 + $0x80] sm:$0xff]
  %v101 = vld [vmem:[%s1 + $0x88] sm:$0xff]
  %v102 = vld [vmem:[%s1 + $0x90] sm:$0xff]
  %v103 = vld [vmem:[%s1 + $0x98] sm:$0xff]
  %v104 = vld [vmem:[%s1 + $0xa0] sm:$0xff]
  %v105 = vld [vmem:[%s1 + $0xa8] sm:$0xff]
  %v106 = vld [vmem:[%s1 + $0xb0] sm:$0xff]
  %v107 = vld [vmem:[%s1 + $0xb8] sm:$0xff]
  %v108 = vld [vmem:[%s1 + $0xc0] sm:$0xff]
  %v109 = vld [vmem:[%s1 + $0xc8] sm:$0xff]
  %v110 = vld [vmem:[%s1 + $0xd0] sm:$0xff]
  %v111 = vld [vmem:[%s1 + $0xd8] sm:$0xff]
  %v112 = vld [vmem:[%s1 + $0xe0] sm:$0xff]
  %v113 = vld [vmem:[%s1 + $0xe8] sm:$0xff]
  %v114 = vld [vmem:[%s1 + $0xf0] sm:$0xff]
  %v115 = vld [vmem:[%s1 + $0xf8] sm:$0xff]
  %116 = vmatprep.subr.mxu0 0.0
  %117 = vmatpush1.msra.mxu0 %v84
  %118 = vmatprep.subr.mxu0 0.0
  %119 = vmatpush1.msra.mxu0 %v85
  %120 = vmatprep.subr.mxu0 0.0
  %121 = vmatpush1.msra.mxu0 %v86
  %122 = vmatprep.subr.mxu0 0.0
  %123 = vmatpush1.msra.mxu0 %v87
  %124 = vmatprep.subr.mxu0 0.0
  %125 = vmatpush1.msra.mxu0 %v88
  %126 = vmatprep.subr.mxu0 0.0
  %127 = vmatpush1.msra.mxu0 %v89
  %128 = vmatprep.subr.mxu0 0.0
  %129 = vmatpush1.msra.mxu0 %v90
  %130 = vmatprep.subr.mxu0 0.0
  %131 = vmatpush1.msra.mxu0 %v91
  %132 = vmatprep.subr.mxu0 0.0
  %133 = vmatpush1.msra.mxu0 %v92
  %134 = vmatprep.subr.mxu0 0.0
  %135 = vmatpush1.msra.mxu0 %v93
  %136 = vmatprep.subr.mxu0 0.0
  %137 = vmatpush1.msra.mxu0 %v94
  %138 = vmatprep.subr.mxu0 0.0
  %139 = vmatpush1.msra.mxu0 %v95
  %140 = vmatprep.subr.mxu0 0.0
  %141 = vmatpush1.msra.mxu0 %v96
  %142 = vmatprep.subr.mxu0 0.0
  %143 = vmatpush1.msra.mxu0 %v97
  %144 = vmatprep.subr.mxu0 0.0
  %145 = vmatpush1.msra.mxu0 %v98
  %146 = vmatprep.subr.mxu0 0.0
  %147 = vmatpush1.msra.mxu0 %v99
  %148 = vmatprep.subr.mxu0 0.0
  %149 = vmatpush1.msra.mxu0 %v100
  %150 = vmatprep.subr.mxu0 0.0
  %151 = vmatpush1.msra.mxu0 %v101
  %152 = vmatprep.subr.mxu0 0.0
  %153 = vmatpush1.msra.mxu0 %v102
  %154 = vmatprep.subr.mxu0 0.0
  %155 = vmatpush1.msra.mxu0 %v103
  %156 = vmatprep.subr.mxu0 0.0
  %157 = vmatpush1.msra.mxu0 %v104
  %158 = vmatprep.subr.mxu0 0.0
  %159 = vmatpush1.msra.mxu0 %v105
  %160 = vmatprep.subr.mxu0 0.0
  %161 = vmatpush1.msra.mxu0 %v106
  %162 = vmatprep.subr.mxu0 0.0
  %163 = vmatpush1.msra.mxu0 %v107
  %164 = vmatprep.subr.mxu0 0.0
  %165 = vmatpush1.msra.mxu0 %v108
  %166 = vmatprep.subr.mxu0 0.0
  %167 = vmatpush1.msra.mxu0 %v109
  %168 = vmatprep.subr.mxu0 0.0
  %169 = vmatpush1.msra.mxu0 %v110
  %170 = vmatprep.subr.mxu0 0.0
  %171 = vmatpush1.msra.mxu0 %v111
  %172 = vmatprep.subr.mxu0 0.0
  %173 = vmatpush1.msra.mxu0 %v112
  %174 = vmatprep.subr.mxu0 0.0
  %175 = vmatpush1.msra.mxu0 %v113
  %176 = vmatprep.subr.mxu0 0.0
  %177 = vmatpush1.msra.mxu0 %v114
  %178 = vmatprep.subr.mxu0 0.0
  %179 = vmatpush1.msra.mxu0 %v115
  %180 = vmatprep.mubr.f32.mxu0 %v21
  %181 = vmatmul.mubr.f32.gmra.mrb[0].mxu0 %v20
  %v182 = vpop.f32.mrb[0].mxu0
  %v183 = vadd.f32 0.0, %v182
  %v184 = vpop.f32.mrb[0].mxu0
  %185 = vmatprep.mubr.f32.mxu0 %v23
  %186 = vmatmul.mubr.f32.gmra.mrb[0].mxu0 %v22
  %v187 = vpop.f32.mrb[0].mxu0
  %v188 = vadd.f32 0.0, %v187
  %v189 = vpop.f32.mrb[0].mxu0
  %190 = vmatprep.mubr.f32.mxu0 %v25
  %191 = vmatmul.mubr.f32.gmra.mrb[0].mxu0 %v24
  %v192 = vpop.f32.mrb[0].mxu0
  %v193 = vadd.f32 0.0, %v192
  %v194 = vpop.f32.mrb[0].mxu0
  %195 = vmatprep.mubr.f32.mxu0 %v27
  %196 = vmatmul.mubr.f32.gmra.mrb[0].mxu0 %v26
  %v197 = vpop.f32.mrb[0].mxu0
  %v198 = vadd.f32 0.0, %v197
  %v199 = vpop.f32.mrb[0].mxu0
  %200 = vmatprep.mubr.f32.mxu0 %v29
  %201 = vmatmul.mubr.f32.gmra.mrb[0].mxu0 %v28
  %v202 = vpop.f32.mrb[0].mxu0
  %v203 = vadd.f32 0.0, %v202
  %v204 = vpop.f32.mrb[0].mxu0
  %205 = vmatprep.mubr.f32.mxu0 %v31
  %206 = vmatmul.mubr.f32.gmra.mrb[0].mxu0 %v30
  %v207 = vpop.f32.mrb[0].mxu0
  %v208 = vadd.f32 0.0, %v207
  %v209 = vpop.f32.mrb[0].mxu0
  %210 = vmatprep.mubr.f32.mxu0 %v33
  %211 = vmatmul.mubr.f32.gmra.mrb[0].mxu0 %v32
  %v212 = vpop.f32.mrb[0].mxu0
  %v213 = vadd.f32 0.0, %v212
  %v214 = vpop.f32.mrb[0].mxu0
  %215 = vmatprep.mubr.f32.mxu0 %v35
  %216 = vmatmul.mubr.f32.gmra.mrb[0].mxu0 %v34
  %v217 = vpop.f32.mrb[0].mxu0
  %v218 = vadd.f32 0.0, %v217
  %v219 = vpop.f32.mrb[0].mxu0
  %220 = vmatprep.mubr.f32.mxu0 %v37
  %221 = vmatmul.mubr.f32.gmra.mrb[0].mxu0 %v36
  %v222 = vpop.f32.mrb[0].mxu0
  %v223 = vadd.f32 0.0, %v222
  %v224 = vpop.f32.mrb[0].mxu0
  %225 = vmatprep.mubr.f32.mxu0 %v39
  %226 = vmatmul.mubr.f32.gmra.mrb[0].mxu0 %v38
  %v227 = vpop.f32.mrb[0].mxu0
  %v228 = vadd.f32 0.0, %v227
  %v229 = vpop.f32.mrb[0].mxu0
  %230 = vmatprep.mubr.f32.mxu0 %v41
  %231 = vmatmul.mubr.f32.gmra.mrb[0].mxu0 %v40
  %v232 = vpop.f32.mrb[0].mxu0
  %v233 = vadd.f32 0.0, %v232
  %v234 = vpop.f32.mrb[0].mxu0
  %235 = vmatprep.mubr.f32.mxu0 %v43
  %236 = vmatmul.mubr.f32.gmra.mrb[0].mxu0 %v42
  %v237 = vpop.f32.mrb[0].mxu0
  %v238 = vadd.f32 0.0, %v237
  %v239 = vpop.f32.mrb[0].mxu0
  %240 = vmatprep.mubr.f32.mxu0 %v45
  %241 = vmatmul.mubr.f32.gmra.mrb[0].mxu0 %v44
  %v242 = vpop.f32.mrb[0].mxu0
  %v243 = vadd.f32 0.0, %v242
  %v244 = vpop.f32.mrb[0].mxu0
  %245 = vmatprep.mubr.f32.mxu0 %v47
  %246 = vmatmul.mubr.f32.gmra.mrb[0].mxu0 %v46
  %v247 = vpop.f32.mrb[0].mxu0
  %v248 = vadd.f32 0.0, %v247
  %v249 = vpop.f32.mrb[0].mxu0
  %250 = vmatprep.mubr.f32.mxu0 %v49
  %251 = vmatmul.mubr.f32.gmra.mrb[0].mxu0 %v48
  %v252 = vpop.f32.mrb[0].mxu0
  %v253 = vadd.f32 0.0, %v252
  %v254 = vpop.f32.mrb[0].mxu0
  %255 = vmatprep.mubr.f32.mxu0 %v51
  %256 = vmatmul.mubr.f32.gmra.mrb[0].mxu0 %v50
  %v257 = vpop.f32.mrb[0].mxu0
  %v258 = vadd.f32 0.0, %v257
  %v259 = vpop.f32.mrb[0].mxu0
  %260 = vmatprep.mubr.f32.mxu0 %v53
  %261 = vmatmul.mubr.f32.gmra.mrb[0].mxu0 %v52
  %v262 = vpop.f32.mrb[0].mxu0
  %v263 = vadd.f32 0.0, %v262
  %v264 = vpop.f32.mrb[0].mxu0
  %265 = vmatprep.mubr.f32.mxu0 %v55
  %266 = vmatmul.mubr.f32.gmra.mrb[0].mxu0 %v54
  %v267 = vpop.f32.mrb[0].mxu0
  %v268 = vadd.f32 0.0, %v267
  %v269 = vpop.f32.mrb[0].mxu0
  %270 = vmatprep.mubr.f32.mxu0 %v57
  %271 = vmatmul.mubr.f32.gmra.mrb[0].mxu0 %v56
  %v272 = vpop.f32.mrb[0].mxu0
  %v273 = vadd.f32 0.0, %v272
  %v274 = vpop.f32.mrb[0].mxu0
  %275 = vmatprep.mubr.f32.mxu0 %v59
  %276 = vmatmul.mubr.f32.gmra.mrb[0].mxu0 %v58
  %v277 = vpop.f32.mrb[0].mxu0
  %v278 = vadd.f32 0.0, %v277
  %v279 = vpop.f32.mrb[0].mxu0
  %280 = vmatprep.mubr.f32.mxu0 %v61
  %281 = vmatmul.mubr.f32.gmra.mrb[0].mxu0 %v60
  %v282 = vpop.f32.mrb[0].mxu0
  %v283 = vadd.f32 0.0, %v282
  %v284 = vpop.f32.mrb[0].mxu0
  %285 = vmatprep.mubr.f32.mxu0 %v63
  %286 = vmatmul.mubr.f32.gmra.mrb[0].mxu0 %v62
  %v287 = vpop.f32.mrb[0].mxu0
  %v288 = vadd.f32 0.0, %v287
  %v289 = vpop.f32.mrb[0].mxu0
  %290 = vmatprep.mubr.f32.mxu0 %v65
  %291 = vmatmul.mubr.f32.gmra.mrb[0].mxu0 %v64
  %v292 = vpop.f32.mrb[0].mxu0
  %v293 = vadd.f32 0.0, %v292
  %v294 = vpop.f32.mrb[0].mxu0
  %295 = vmatprep.mubr.f32.mxu0 %v67
  %296 = vmatmul.mubr.f32.gmra.mrb[0].mxu0 %v66
  %v297 = vpop.f32.mrb[0].mxu0
  %v298 = vadd.f32 0.0, %v297
  %v299 = vpop.f32.mrb[0].mxu0
  %300 = vmatprep.mubr.f32.mxu0 %v69
  %301 = vmatmul.mubr.f32.gmra.mrb[0].mxu0 %v68
  %v302 = vpop.f32.mrb[0].mxu0
  %v303 = vadd.f32 0.0, %v302
  %v304 = vpop.f32.mrb[0].mxu0
  %305 = vmatprep.mubr.f32.mxu0 %v71
  %306 = vmatmul.mubr.f32.gmra.mrb[0].mxu0 %v70
  %v307 = vpop.f32.mrb[0].mxu0
  %v308 = vadd.f32 0.0, %v307
  %v309 = vpop.f32.mrb[0].mxu0
  %310 = vmatprep.mubr.f32.mxu0 %v73
  %311 = vmatmul.mubr.f32.gmra.mrb[0].mxu0 %v72
  %v312 = vpop.f32.mrb[0].mxu0
  %v313 = vadd.f32 0.0, %v312
  %v314 = vpop.f32.mrb[0].mxu0
  %315 = vmatprep.mubr.f32.mxu0 %v75
  %316 = vmatmul.mubr.f32.gmra.mrb[0].mxu0 %v74
  %v317 = vpop.f32.mrb[0].mxu0
  %v318 = vadd.f32 0.0, %v317
  %v319 = vpop.f32.mrb[0].mxu0
  %320 = vmatprep.mubr.f32.mxu0 %v77
  %321 = vmatmul.mubr.f32.gmra.mrb[0].mxu0 %v76
  %v322 = vpop.f32.mrb[0].mxu0
  %v323 = vadd.f32 0.0, %v322
  %v324 = vpop.f32.mrb[0].mxu0
  %325 = vmatprep.mubr.f32.mxu0 %v79
  %326 = vmatmul.mubr.f32.gmra.mrb[0].mxu0 %v78
  %v327 = vpop.f32.mrb[0].mxu0
  %v328 = vadd.f32 0.0, %v327
  %v329 = vpop.f32.mrb[0].mxu0
  %330 = vmatprep.mubr.f32.mxu0 %v81
  %331 = vmatmul.mubr.f32.gmra.mrb[0].mxu0 %v80
  %v332 = vpop.f32.mrb[0].mxu0
  %v333 = vadd.f32 0.0, %v332
  %v334 = vpop.f32.mrb[0].mxu0
  %335 = vmatprep.mubr.f32.mxu0 %v83
  %336 = vmatmul.mubr.f32.gmra.mrb[0].mxu0 %v82
  %v337 = vpop.f32.mrb[0].mxu0
  %v338 = vadd.f32 0.0, %v337
  %v339 = vpop.f32.mrb[0].mxu0
  %340 = vdwg.mxu0
  %v341 = vld [vmem:[%s4] sm:$0xff]
  %v342 = vld [vmem:[%s4 + $0x8] sm:$0xff]
  %v343 = vld [vmem:[%s4 + $0x10] sm:$0xff]
  %v344 = vld [vmem:[%s4 + $0x18] sm:$0xff]
  %346 = vset.pattern.permute.xlu0 0
  %347 = vperm.xlu0 %346, %v341
  %v348 = vpop.permute.xlu0 %347
  %351 = vset.pattern.permute.xlu0 0
  %352 = vperm.xlu0 %351, %v342
  %v353 = vpop.permute.xlu0 %352
  %356 = vset.pattern.permute.xlu0 0
  %357 = vperm.xlu0 %356, %v343
  %v358 = vpop.permute.xlu0 %357
  %361 = vset.pattern.permute.xlu0 0
  %362 = vperm.xlu0 %361, %v344
  %v363 = vpop.permute.xlu0 %362
  %v365 = vld [vmem:[%s0] sm:$0xff]
  %s366 = scalar_lea.vmem %s0, 8
  %v367 = vld [vmem:[%s366] sm:$0xff]
  %s368 = scalar_lea.vmem %s0, 16
  %v369 = vld [vmem:[%s368] sm:$0xff]
  %s370 = scalar_lea.vmem %s0, 24
  %v371 = vld [vmem:[%s370] sm:$0xff]
  %s372 = scalar_lea.vmem %s0, 32
  %v373 = vld [vmem:[%s372] sm:$0xff]
  %s374 = scalar_lea.vmem %s0, 40
  %v375 = vld [vmem:[%s374] sm:$0xff]
  %s376 = scalar_lea.vmem %s0, 48
  %v377 = vld [vmem:[%s376] sm:$0xff]
  %s378 = scalar_lea.vmem %s0, 56
  %v379 = vld [vmem:[%s378] sm:$0xff]
  %v380 = vlaneseq
  %v381 = vshrl.u32 %v380, 7
  %v382 = vsub.s32 0, %v381
  %v383 = vrot.slane %v365, %v382
  %v384 = vmul.f32 %v383, %v183
  %v385 = vmul.f32 %v383, %v188
  %v386 = vmul.f32 %v383, %v193
  %v387 = vmul.f32 %v383, %v198
  %v388 = vlaneseq
  %v389 = vshrl.u32 %v388, 7
  %v390 = vsub.s32 1, %v389
  %v391 = vrot.slane %v365, %v390
  %v392 = vmul.f32 %v391, %v203
  %v393 = vmul.f32 %v391, %v208
  %v394 = vmul.f32 %v391, %v213
  %v395 = vmul.f32 %v391, %v218
  %v396 = vadd.f32 %v384, %v392
  %v397 = vadd.f32 %v385, %v393
  %v398 = vadd.f32 %v386, %v394
  %v399 = vadd.f32 %v387, %v395
  %v400 = vlaneseq
  %v401 = vshrl.u32 %v400, 7
  %v402 = vsub.s32 2, %v401
  %v403 = vrot.slane %v365, %v402
  %v404 = vmul.f32 %v403, %v223
  %v405 = vmul.f32 %v403, %v228
  %v406 = vmul.f32 %v403, %v233
  %v407 = vmul.f32 %v403, %v238
  %v408 = vadd.f32 %v396, %v404
  %v409 = vadd.f32 %v397, %v405
  %v410 = vadd.f32 %v398, %v406
  %v411 = vadd.f32 %v399, %v407
  %v412 = vlaneseq
  %v413 = vshrl.u32 %v412, 7
  %v414 = vsub.s32 3, %v413
  %v415 = vrot.slane %v365, %v414
  %v416 = vmul.f32 %v415, %v243
  %v417 = vmul.f32 %v415, %v248
  %v418 = vmul.f32 %v415, %v253
  %v419 = vmul.f32 %v415, %v258
  %v420 = vadd.f32 %v408, %v416
  %v421 = vadd.f32 %v409, %v417
  %v422 = vadd.f32 %v410, %v418
  %v423 = vadd.f32 %v411, %v419
  %v424 = vlaneseq
  %v425 = vshrl.u32 %v424, 7
  %v426 = vsub.s32 4, %v425
  %v427 = vrot.slane %v365, %v426
  %v428 = vmul.f32 %v427, %v263
  %v429 = vmul.f32 %v427, %v268
  %v430 = vmul.f32 %v427, %v273
  %v431 = vmul.f32 %v427, %v278
  %v432 = vadd.f32 %v420, %v428
  %v433 = vadd.f32 %v421, %v429
  %v434 = vadd.f32 %v422, %v430
  %v435 = vadd.f32 %v423, %v431
  %v436 = vlaneseq
  %v437 = vshrl.u32 %v436, 7
  %v438 = vsub.s32 5, %v437
  %v439 = vrot.slane %v365, %v438
  %v440 = vmul.f32 %v439, %v283
  %v441 = vmul.f32 %v439, %v288
  %v442 = vmul.f32 %v439, %v293
  %v443 = vmul.f32 %v439, %v298
  %v444 = vadd.f32 %v432, %v440
  %v445 = vadd.f32 %v433, %v441
  %v446 = vadd.f32 %v434, %v442
  %v447 = vadd.f32 %v435, %v443
  %v448 = vlaneseq
  %v449 = vshrl.u32 %v448, 7
  %v450 = vsub.s32 6, %v449
  %v451 = vrot.slane %v365, %v450
  %v452 = vmul.f32 %v451, %v303
  %v453 = vmul.f32 %v451, %v308
  %v454 = vmul.f32 %v451, %v313
  %v455 = vmul.f32 %v451, %v318
  %v456 = vadd.f32 %v444, %v452
  %v457 = vadd.f32 %v445, %v453
  %v458 = vadd.f32 %v446, %v454
  %v459 = vadd.f32 %v447, %v455
  %v460 = vlaneseq
  %v461 = vshrl.u32 %v460, 7
  %v462 = vsub.s32 7, %v461
  %v463 = vrot.slane %v365, %v462
  %v464 = vmul.f32 %v463, %v323
  %v465 = vmul.f32 %v463, %v328
  %v466 = vmul.f32 %v463, %v333
  %v467 = vmul.f32 %v463, %v338
  %v468 = vadd.f32 %v456, %v464
  %v469 = vadd.f32 %v457, %v465
  %v470 = vadd.f32 %v458, %v466
  %v471 = vadd.f32 %v459, %v467
  %v472 = vadd.f32 %v468, %v348
  %v473 = vadd.f32 %v469, %v353
  %v474 = vadd.f32 %v470, %v358
  %v475 = vadd.f32 %v471, %v363
  %v476 = vmax.f32 %v472, 0.0
  %v477 = vmax.f32 %v473, 0.0
  %v478 = vmax.f32 %v474, 0.0
  %v479 = vmax.f32 %v475, 0.0
  %v480 = vlaneseq
  %v481 = vshrl.u32 %v480, 7
  %v482 = vsub.s32 0, %v481
  %v483 = vrot.slane %v367, %v482
  %v484 = vmul.f32 %v483, %v183
  %v485 = vmul.f32 %v483, %v188
  %v486 = vmul.f32 %v483, %v193
  %v487 = vmul.f32 %v483, %v198
  %v488 = vlaneseq
  %v489 = vshrl.u32 %v488, 7
  %v490 = vsub.s32 1, %v489
  %v491 = vrot.slane %v367, %v490
  %v492 = vmul.f32 %v491, %v203
  %v493 = vmul.f32 %v491, %v208
  %v494 = vmul.f32 %v491, %v213
  %v495 = vmul.f32 %v491, %v218
  %v496 = vadd.f32 %v484, %v492
  %v497 = vadd.f32 %v485, %v493
  %v498 = vadd.f32 %v486, %v494
  %v499 = vadd.f32 %v487, %v495
  %v500 = vlaneseq
  %v501 = vshrl.u32 %v500, 7
  %v502 = vsub.s32 2, %v501
  %v503 = vrot.slane %v367, %v502
  %v504 = vmul.f32 %v503, %v223
  %v505 = vmul.f32 %v503, %v228
  %v506 = vmul.f32 %v503, %v233
  %v507 = vmul.f32 %v503, %v238
  %v508 = vadd.f32 %v496, %v504
  %v509 = vadd.f32 %v497, %v505
  %v510 = vadd.f32 %v498, %v506
  %v511 = vadd.f32 %v499, %v507
  %v512 = vlaneseq
  %v513 = vshrl.u32 %v512, 7
  %v514 = vsub.s32 3, %v513
  %v515 = vrot.slane %v367, %v514
  %v516 = vmul.f32 %v515, %v243
  %v517 = vmul.f32 %v515, %v248
  %v518 = vmul.f32 %v515, %v253
  %v519 = vmul.f32 %v515, %v258
  %v520 = vadd.f32 %v508, %v516
  %v521 = vadd.f32 %v509, %v517
  %v522 = vadd.f32 %v510, %v518
  %v523 = vadd.f32 %v511, %v519
  %v524 = vlaneseq
  %v525 = vshrl.u32 %v524, 7
  %v526 = vsub.s32 4, %v525
  %v527 = vrot.slane %v367, %v526
  %v528 = vmul.f32 %v527, %v263
  %v529 = vmul.f32 %v527, %v268
  %v530 = vmul.f32 %v527, %v273
  %v531 = vmul.f32 %v527, %v278
  %v532 = vadd.f32 %v520, %v528
  %v533 = vadd.f32 %v521, %v529
  %v534 = vadd.f32 %v522, %v530
  %v535 = vadd.f32 %v523, %v531
  %v536 = vlaneseq
  %v537 = vshrl.u32 %v536, 7
  %v538 = vsub.s32 5, %v537
  %v539 = vrot.slane %v367, %v538
  %v540 = vmul.f32 %v539, %v283
  %v541 = vmul.f32 %v539, %v288
  %v542 = vmul.f32 %v539, %v293
  %v543 = vmul.f32 %v539, %v298
  %v544 = vadd.f32 %v532, %v540
  %v545 = vadd.f32 %v533, %v541
  %v546 = vadd.f32 %v534, %v542
  %v547 = vadd.f32 %v535, %v543
  %v548 = vlaneseq
  %v549 = vshrl.u32 %v548, 7
  %v550 = vsub.s32 6, %v549
  %v551 = vrot.slane %v367, %v550
  %v552 = vmul.f32 %v551, %v303
  %v553 = vmul.f32 %v551, %v308
  %v554 = vmul.f32 %v551, %v313
  %v555 = vmul.f32 %v551, %v318
  %v556 = vadd.f32 %v544, %v552
  %v557 = vadd.f32 %v545, %v553
  %v558 = vadd.f32 %v546, %v554
  %v559 = vadd.f32 %v547, %v555
  %v560 = vlaneseq
  %v561 = vshrl.u32 %v560, 7
  %v562 = vsub.s32 7, %v561
  %v563 = vrot.slane %v367, %v562
  %v564 = vmul.f32 %v563, %v323
  %v565 = vmul.f32 %v563, %v328
  %v566 = vmul.f32 %v563, %v333
  %v567 = vmul.f32 %v563, %v338
  %v568 = vadd.f32 %v556, %v564
  %v569 = vadd.f32 %v557, %v565
  %v570 = vadd.f32 %v558, %v566
  %v571 = vadd.f32 %v559, %v567
  %v572 = vadd.f32 %v568, %v348
  %v573 = vadd.f32 %v569, %v353
  %v574 = vadd.f32 %v570, %v358
  %v575 = vadd.f32 %v571, %v363
  %v576 = vmax.f32 %v572, 0.0
  %v577 = vmax.f32 %v573, 0.0
  %v578 = vmax.f32 %v574, 0.0
  %v579 = vmax.f32 %v575, 0.0
  %v580 = vlaneseq
  %v581 = vshrl.u32 %v580, 7
  %v582 = vsub.s32 0, %v581
  %v583 = vrot.slane %v369, %v582
  %v584 = vmul.f32 %v583, %v183
  %v585 = vmul.f32 %v583, %v188
  %v586 = vmul.f32 %v583, %v193
  %v587 = vmul.f32 %v583, %v198
  %v588 = vlaneseq
  %v589 = vshrl.u32 %v588, 7
  %v590 = vsub.s32 1, %v589
  %v591 = vrot.slane %v369, %v590
  %v592 = vmul.f32 %v591, %v203
  %v593 = vmul.f32 %v591, %v208
  %v594 = vmul.f32 %v591, %v213
  %v595 = vmul.f32 %v591, %v218
  %v596 = vadd.f32 %v584, %v592
  %v597 = vadd.f32 %v585, %v593
  %v598 = vadd.f32 %v586, %v594
  %v599 = vadd.f32 %v587, %v595
  %v600 = vlaneseq
  %v601 = vshrl.u32 %v600, 7
  %v602 = vsub.s32 2, %v601
  %v603 = vrot.slane %v369, %v602
  %v604 = vmul.f32 %v603, %v223
  %v605 = vmul.f32 %v603, %v228
  %v606 = vmul.f32 %v603, %v233
  %v607 = vmul.f32 %v603, %v238
  %v608 = vadd.f32 %v596, %v604
  %v609 = vadd.f32 %v597, %v605
  %v610 = vadd.f32 %v598, %v606
  %v611 = vadd.f32 %v599, %v607
  %v612 = vlaneseq
  %v613 = vshrl.u32 %v612, 7
  %v614 = vsub.s32 3, %v613
  %v615 = vrot.slane %v369, %v614
  %v616 = vmul.f32 %v615, %v243
  %v617 = vmul.f32 %v615, %v248
  %v618 = vmul.f32 %v615, %v253
  %v619 = vmul.f32 %v615, %v258
  %v620 = vadd.f32 %v608, %v616
  %v621 = vadd.f32 %v609, %v617
  %v622 = vadd.f32 %v610, %v618
  %v623 = vadd.f32 %v611, %v619
  %v624 = vlaneseq
  %v625 = vshrl.u32 %v624, 7
  %v626 = vsub.s32 4, %v625
  %v627 = vrot.slane %v369, %v626
  %v628 = vmul.f32 %v627, %v263
  %v629 = vmul.f32 %v627, %v268
  %v630 = vmul.f32 %v627, %v273
  %v631 = vmul.f32 %v627, %v278
  %v632 = vadd.f32 %v620, %v628
  %v633 = vadd.f32 %v621, %v629
  %v634 = vadd.f32 %v622, %v630
  %v635 = vadd.f32 %v623, %v631
  %v636 = vlaneseq
  %v637 = vshrl.u32 %v636, 7
  %v638 = vsub.s32 5, %v637
  %v639 = vrot.slane %v369, %v638
  %v640 = vmul.f32 %v639, %v283
  %v641 = vmul.f32 %v639, %v288
  %v642 = vmul.f32 %v639, %v293
  %v643 = vmul.f32 %v639, %v298
  %v644 = vadd.f32 %v632, %v640
  %v645 = vadd.f32 %v633, %v641
  %v646 = vadd.f32 %v634, %v642
  %v647 = vadd.f32 %v635, %v643
  %v648 = vlaneseq
  %v649 = vshrl.u32 %v648, 7
  %v650 = vsub.s32 6, %v649
  %v651 = vrot.slane %v369, %v650
  %v652 = vmul.f32 %v651, %v303
  %v653 = vmul.f32 %v651, %v308
  %v654 = vmul.f32 %v651, %v313
  %v655 = vmul.f32 %v651, %v318
  %v656 = vadd.f32 %v644, %v652
  %v657 = vadd.f32 %v645, %v653
  %v658 = vadd.f32 %v646, %v654
  %v659 = vadd.f32 %v647, %v655
  %v660 = vlaneseq
  %v661 = vshrl.u32 %v660, 7
  %v662 = vsub.s32 7, %v661
  %v663 = vrot.slane %v369, %v662
  %v664 = vmul.f32 %v663, %v323
  %v665 = vmul.f32 %v663, %v328
  %v666 = vmul.f32 %v663, %v333
  %v667 = vmul.f32 %v663, %v338
  %v668 = vadd.f32 %v656, %v664
  %v669 = vadd.f32 %v657, %v665
  %v670 = vadd.f32 %v658, %v666
  %v671 = vadd.f32 %v659, %v667
  %v672 = vadd.f32 %v668, %v348
  %v673 = vadd.f32 %v669, %v353
  %v674 = vadd.f32 %v670, %v358
  %v675 = vadd.f32 %v671, %v363
  %v676 = vmax.f32 %v672, 0.0
  %v677 = vmax.f32 %v673, 0.0
  %v678 = vmax.f32 %v674, 0.0
  %v679 = vmax.f32 %v675, 0.0
  %v680 = vlaneseq
  %v681 = vshrl.u32 %v680, 7
  %v682 = vsub.s32 0, %v681
  %v683 = vrot.slane %v371, %v682
  %v684 = vmul.f32 %v683, %v183
  %v685 = vmul.f32 %v683, %v188
  %v686 = vmul.f32 %v683, %v193
  %v687 = vmul.f32 %v683, %v198
  %v688 = vlaneseq
  %v689 = vshrl.u32 %v688, 7
  %v690 = vsub.s32 1, %v689
  %v691 = vrot.slane %v371, %v690
  %v692 = vmul.f32 %v691, %v203
  %v693 = vmul.f32 %v691, %v208
  %v694 = vmul.f32 %v691, %v213
  %v695 = vmul.f32 %v691, %v218
  %v696 = vadd.f32 %v684, %v692
  %v697 = vadd.f32 %v685, %v693
  %v698 = vadd.f32 %v686, %v694
  %v699 = vadd.f32 %v687, %v695
  %v700 = vlaneseq
  %v701 = vshrl.u32 %v700, 7
  %v702 = vsub.s32 2, %v701
  %v703 = vrot.slane %v371, %v702
  %v704 = vmul.f32 %v703, %v223
  %v705 = vmul.f32 %v703, %v228
  %v706 = vmul.f32 %v703, %v233
  %v707 = vmul.f32 %v703, %v238
  %v708 = vadd.f32 %v696, %v704
  %v709 = vadd.f32 %v697, %v705
  %v710 = vadd.f32 %v698, %v706
  %v711 = vadd.f32 %v699, %v707
  %v712 = vlaneseq
  %v713 = vshrl.u32 %v712, 7
  %v714 = vsub.s32 3, %v713
  %v715 = vrot.slane %v371, %v714
  %v716 = vmul.f32 %v715, %v243
  %v717 = vmul.f32 %v715, %v248
  %v718 = vmul.f32 %v715, %v253
  %v719 = vmul.f32 %v715, %v258
  %v720 = vadd.f32 %v708, %v716
  %v721 = vadd.f32 %v709, %v717
  %v722 = vadd.f32 %v710, %v718
  %v723 = vadd.f32 %v711, %v719
  %v724 = vlaneseq
  %v725 = vshrl.u32 %v724, 7
  %v726 = vsub.s32 4, %v725
  %v727 = vrot.slane %v371, %v726
  %v728 = vmul.f32 %v727, %v263
  %v729 = vmul.f32 %v727, %v268
  %v730 = vmul.f32 %v727, %v273
  %v731 = vmul.f32 %v727, %v278
  %v732 = vadd.f32 %v720, %v728
  %v733 = vadd.f32 %v721, %v729
  %v734 = vadd.f32 %v722, %v730
  %v735 = vadd.f32 %v723, %v731
  %v736 = vlaneseq
  %v737 = vshrl.u32 %v736, 7
  %v738 = vsub.s32 5, %v737
  %v739 = vrot.slane %v371, %v738
  %v740 = vmul.f32 %v739, %v283
  %v741 = vmul.f32 %v739, %v288
  %v742 = vmul.f32 %v739, %v293
  %v743 = vmul.f32 %v739, %v298
  %v744 = vadd.f32 %v732, %v740
  %v745 = vadd.f32 %v733, %v741
  %v746 = vadd.f32 %v734, %v742
  %v747 = vadd.f32 %v735, %v743
  %v748 = vlaneseq
  %v749 = vshrl.u32 %v748, 7
  %v750 = vsub.s32 6, %v749
  %v751 = vrot.slane %v371, %v750
  %v752 = vmul.f32 %v751, %v303
  %v753 = vmul.f32 %v751, %v308
  %v754 = vmul.f32 %v751, %v313
  %v755 = vmul.f32 %v751, %v318
  %v756 = vadd.f32 %v744, %v752
  %v757 = vadd.f32 %v745, %v753
  %v758 = vadd.f32 %v746, %v754
  %v759 = vadd.f32 %v747, %v755
  %v760 = vlaneseq
  %v761 = vshrl.u32 %v760, 7
  %v762 = vsub.s32 7, %v761
  %v763 = vrot.slane %v371, %v762
  %v764 = vmul.f32 %v763, %v323
  %v765 = vmul.f32 %v763, %v328
  %v766 = vmul.f32 %v763, %v333
  %v767 = vmul.f32 %v763, %v338
  %v768 = vadd.f32 %v756, %v764
  %v769 = vadd.f32 %v757, %v765
  %v770 = vadd.f32 %v758, %v766
  %v771 = vadd.f32 %v759, %v767
  %v772 = vadd.f32 %v768, %v348
  %v773 = vadd.f32 %v769, %v353
  %v774 = vadd.f32 %v770, %v358
  %v775 = vadd.f32 %v771, %v363
  %v776 = vmax.f32 %v772, 0.0
  %v777 = vmax.f32 %v773, 0.0
  %v778 = vmax.f32 %v774, 0.0
  %v779 = vmax.f32 %v775, 0.0
  %v780 = vlaneseq
  %v781 = vshrl.u32 %v780, 7
  %v782 = vsub.s32 0, %v781
  %v783 = vrot.slane %v373, %v782
  %v784 = vmul.f32 %v783, %v183
  %v785 = vmul.f32 %v783, %v188
  %v786 = vmul.f32 %v783, %v193
  %v787 = vmul.f32 %v783, %v198
  %v788 = vlaneseq
  %v789 = vshrl.u32 %v788, 7
  %v790 = vsub.s32 1, %v789
  %v791 = vrot.slane %v373, %v790
  %v792 = vmul.f32 %v791, %v203
  %v793 = vmul.f32 %v791, %v208
  %v794 = vmul.f32 %v791, %v213
  %v795 = vmul.f32 %v791, %v218
  %v796 = vadd.f32 %v784, %v792
  %v797 = vadd.f32 %v785, %v793
  %v798 = vadd.f32 %v786, %v794
  %v799 = vadd.f32 %v787, %v795
  %v800 = vlaneseq
  %v801 = vshrl.u32 %v800, 7
  %v802 = vsub.s32 2, %v801
  %v803 = vrot.slane %v373, %v802
  %v804 = vmul.f32 %v803, %v223
  %v805 = vmul.f32 %v803, %v228
  %v806 = vmul.f32 %v803, %v233
  %v807 = vmul.f32 %v803, %v238
  %v808 = vadd.f32 %v796, %v804
  %v809 = vadd.f32 %v797, %v805
  %v810 = vadd.f32 %v798, %v806
  %v811 = vadd.f32 %v799, %v807
  %v812 = vlaneseq
  %v813 = vshrl.u32 %v812, 7
  %v814 = vsub.s32 3, %v813
  %v815 = vrot.slane %v373, %v814
  %v816 = vmul.f32 %v815, %v243
  %v817 = vmul.f32 %v815, %v248
  %v818 = vmul.f32 %v815, %v253
  %v819 = vmul.f32 %v815, %v258
  %v820 = vadd.f32 %v808, %v816
  %v821 = vadd.f32 %v809, %v817
  %v822 = vadd.f32 %v810, %v818
  %v823 = vadd.f32 %v811, %v819
  %v824 = vlaneseq
  %v825 = vshrl.u32 %v824, 7
  %v826 = vsub.s32 4, %v825
  %v827 = vrot.slane %v373, %v826
  %v828 = vmul.f32 %v827, %v263
  %v829 = vmul.f32 %v827, %v268
  %v830 = vmul.f32 %v827, %v273
  %v831 = vmul.f32 %v827, %v278
  %v832 = vadd.f32 %v820, %v828
  %v833 = vadd.f32 %v821, %v829
  %v834 = vadd.f32 %v822, %v830
  %v835 = vadd.f32 %v823, %v831
  %v836 = vlaneseq
  %v837 = vshrl.u32 %v836, 7
  %v838 = vsub.s32 5, %v837
  %v839 = vrot.slane %v373, %v838
  %v840 = vmul.f32 %v839, %v283
  %v841 = vmul.f32 %v839, %v288
  %v842 = vmul.f32 %v839, %v293
  %v843 = vmul.f32 %v839, %v298
  %v844 = vadd.f32 %v832, %v840
  %v845 = vadd.f32 %v833, %v841
  %v846 = vadd.f32 %v834, %v842
  %v847 = vadd.f32 %v835, %v843
  %v848 = vlaneseq
  %v849 = vshrl.u32 %v848, 7
  %v850 = vsub.s32 6, %v849
  %v851 = vrot.slane %v373, %v850
  %v852 = vmul.f32 %v851, %v303
  %v853 = vmul.f32 %v851, %v308
  %v854 = vmul.f32 %v851, %v313
  %v855 = vmul.f32 %v851, %v318
  %v856 = vadd.f32 %v844, %v852
  %v857 = vadd.f32 %v845, %v853
  %v858 = vadd.f32 %v846, %v854
  %v859 = vadd.f32 %v847, %v855
  %v860 = vlaneseq
  %v861 = vshrl.u32 %v860, 7
  %v862 = vsub.s32 7, %v861
  %v863 = vrot.slane %v373, %v862
  %v864 = vmul.f32 %v863, %v323
  %v865 = vmul.f32 %v863, %v328
  %v866 = vmul.f32 %v863, %v333
  %v867 = vmul.f32 %v863, %v338
  %v868 = vadd.f32 %v856, %v864
  %v869 = vadd.f32 %v857, %v865
  %v870 = vadd.f32 %v858, %v866
  %v871 = vadd.f32 %v859, %v867
  %v872 = vadd.f32 %v868, %v348
  %v873 = vadd.f32 %v869, %v353
  %v874 = vadd.f32 %v870, %v358
  %v875 = vadd.f32 %v871, %v363
  %v876 = vmax.f32 %v872, 0.0
  %v877 = vmax.f32 %v873, 0.0
  %v878 = vmax.f32 %v874, 0.0
  %v879 = vmax.f32 %v875, 0.0
  %v880 = vlaneseq
  %v881 = vshrl.u32 %v880, 7
  %v882 = vsub.s32 0, %v881
  %v883 = vrot.slane %v375, %v882
  %v884 = vmul.f32 %v883, %v183
  %v885 = vmul.f32 %v883, %v188
  %v886 = vmul.f32 %v883, %v193
  %v887 = vmul.f32 %v883, %v198
  %v888 = vlaneseq
  %v889 = vshrl.u32 %v888, 7
  %v890 = vsub.s32 1, %v889
  %v891 = vrot.slane %v375, %v890
  %v892 = vmul.f32 %v891, %v203
  %v893 = vmul.f32 %v891, %v208
  %v894 = vmul.f32 %v891, %v213
  %v895 = vmul.f32 %v891, %v218
  %v896 = vadd.f32 %v884, %v892
  %v897 = vadd.f32 %v885, %v893
  %v898 = vadd.f32 %v886, %v894
  %v899 = vadd.f32 %v887, %v895
  %v900 = vlaneseq
  %v901 = vshrl.u32 %v900, 7
  %v902 = vsub.s32 2, %v901
  %v903 = vrot.slane %v375, %v902
  %v904 = vmul.f32 %v903, %v223
  %v905 = vmul.f32 %v903, %v228
  %v906 = vmul.f32 %v903, %v233
  %v907 = vmul.f32 %v903, %v238
  %v908 = vadd.f32 %v896, %v904
  %v909 = vadd.f32 %v897, %v905
  %v910 = vadd.f32 %v898, %v906
  %v911 = vadd.f32 %v899, %v907
  %v912 = vlaneseq
  %v913 = vshrl.u32 %v912, 7
  %v914 = vsub.s32 3, %v913
  %v915 = vrot.slane %v375, %v914
  %v916 = vmul.f32 %v915, %v243
  %v917 = vmul.f32 %v915, %v248
  %v918 = vmul.f32 %v915, %v253
  %v919 = vmul.f32 %v915, %v258
  %v920 = vadd.f32 %v908, %v916
  %v921 = vadd.f32 %v909, %v917
  %v922 = vadd.f32 %v910, %v918
  %v923 = vadd.f32 %v911, %v919
  %v924 = vlaneseq
  %v925 = vshrl.u32 %v924, 7
  %v926 = vsub.s32 4, %v925
  %v927 = vrot.slane %v375, %v926
  %v928 = vmul.f32 %v927, %v263
  %v929 = vmul.f32 %v927, %v268
  %v930 = vmul.f32 %v927, %v273
  %v931 = vmul.f32 %v927, %v278
  %v932 = vadd.f32 %v920, %v928
  %v933 = vadd.f32 %v921, %v929
  %v934 = vadd.f32 %v922, %v930
  %v935 = vadd.f32 %v923, %v931
  %v936 = vlaneseq
  %v937 = vshrl.u32 %v936, 7
  %v938 = vsub.s32 5, %v937
  %v939 = vrot.slane %v375, %v938
  %v940 = vmul.f32 %v939, %v283
  %v941 = vmul.f32 %v939, %v288
  %v942 = vmul.f32 %v939, %v293
  %v943 = vmul.f32 %v939, %v298
  %v944 = vadd.f32 %v932, %v940
  %v945 = vadd.f32 %v933, %v941
  %v946 = vadd.f32 %v934, %v942
  %v947 = vadd.f32 %v935, %v943
  %v948 = vlaneseq
  %v949 = vshrl.u32 %v948, 7
  %v950 = vsub.s32 6, %v949
  %v951 = vrot.slane %v375, %v950
  %v952 = vmul.f32 %v951, %v303
  %v953 = vmul.f32 %v951, %v308
  %v954 = vmul.f32 %v951, %v313
  %v955 = vmul.f32 %v951, %v318
  %v956 = vadd.f32 %v944, %v952
  %v957 = vadd.f32 %v945, %v953
  %v958 = vadd.f32 %v946, %v954
  %v959 = vadd.f32 %v947, %v955
  %v960 = vlaneseq
  %v961 = vshrl.u32 %v960, 7
  %v962 = vsub.s32 7, %v961
  %v963 = vrot.slane %v375, %v962
  %v964 = vmul.f32 %v963, %v323
  %v965 = vmul.f32 %v963, %v328
  %v966 = vmul.f32 %v963, %v333
  %v967 = vmul.f32 %v963, %v338
  %v968 = vadd.f32 %v956, %v964
  %v969 = vadd.f32 %v957, %v965
  %v970 = vadd.f32 %v958, %v966
  %v971 = vadd.f32 %v959, %v967
  %v972 = vadd.f32 %v968, %v348
  %v973 = vadd.f32 %v969, %v353
  %v974 = vadd.f32 %v970, %v358
  %v975 = vadd.f32 %v971, %v363
  %v976 = vmax.f32 %v972, 0.0
  %v977 = vmax.f32 %v973, 0.0
  %v978 = vmax.f32 %v974, 0.0
  %v979 = vmax.f32 %v975, 0.0
  %v980 = vlaneseq
  %v981 = vshrl.u32 %v980, 7
  %v982 = vsub.s32 0, %v981
  %v983 = vrot.slane %v377, %v982
  %v984 = vmul.f32 %v983, %v183
  %v985 = vmul.f32 %v983, %v188
  %v986 = vmul.f32 %v983, %v193
  %v987 = vmul.f32 %v983, %v198
  %v988 = vlaneseq
  %v989 = vshrl.u32 %v988, 7
  %v990 = vsub.s32 1, %v989
  %v991 = vrot.slane %v377, %v990
  %v992 = vmul.f32 %v991, %v203
  %v993 = vmul.f32 %v991, %v208
  %v994 = vmul.f32 %v991, %v213
  %v995 = vmul.f32 %v991, %v218
  %v996 = vadd.f32 %v984, %v992
  %v997 = vadd.f32 %v985, %v993
  %v998 = vadd.f32 %v986, %v994
  %v999 = vadd.f32 %v987, %v995
  %v1000 = vlaneseq
  %v1001 = vshrl.u32 %v1000, 7
  %v1002 = vsub.s32 2, %v1001
  %v1003 = vrot.slane %v377, %v1002
  %v1004 = vmul.f32 %v1003, %v223
  %v1005 = vmul.f32 %v1003, %v228
  %v1006 = vmul.f32 %v1003, %v233
  %v1007 = vmul.f32 %v1003, %v238
  %v1008 = vadd.f32 %v996, %v1004
  %v1009 = vadd.f32 %v997, %v1005
  %v1010 = vadd.f32 %v998, %v1006
  %v1011 = vadd.f32 %v999, %v1007
  %v1012 = vlaneseq
  %v1013 = vshrl.u32 %v1012, 7
  %v1014 = vsub.s32 3, %v1013
  %v1015 = vrot.slane %v377, %v1014
  %v1016 = vmul.f32 %v1015, %v243
  %v1017 = vmul.f32 %v1015, %v248
  %v1018 = vmul.f32 %v1015, %v253
  %v1019 = vmul.f32 %v1015, %v258
  %v1020 = vadd.f32 %v1008, %v1016
  %v1021 = vadd.f32 %v1009, %v1017
  %v1022 = vadd.f32 %v1010, %v1018
  %v1023 = vadd.f32 %v1011, %v1019
  %v1024 = vlaneseq
  %v1025 = vshrl.u32 %v1024, 7
  %v1026 = vsub.s32 4, %v1025
  %v1027 = vrot.slane %v377, %v1026
  %v1028 = vmul.f32 %v1027, %v263
  %v1029 = vmul.f32 %v1027, %v268
  %v1030 = vmul.f32 %v1027, %v273
  %v1031 = vmul.f32 %v1027, %v278
  %v1032 = vadd.f32 %v1020, %v1028
  %v1033 = vadd.f32 %v1021, %v1029
  %v1034 = vadd.f32 %v1022, %v1030
  %v1035 = vadd.f32 %v1023, %v1031
  %v1036 = vlaneseq
  %v1037 = vshrl.u32 %v1036, 7
  %v1038 = vsub.s32 5, %v1037
  %v1039 = vrot.slane %v377, %v1038
  %v1040 = vmul.f32 %v1039, %v283
  %v1041 = vmul.f32 %v1039, %v288
  %v1042 = vmul.f32 %v1039, %v293
  %v1043 = vmul.f32 %v1039, %v298
  %v1044 = vadd.f32 %v1032, %v1040
  %v1045 = vadd.f32 %v1033, %v1041
  %v1046 = vadd.f32 %v1034, %v1042
  %v1047 = vadd.f32 %v1035, %v1043
  %v1048 = vlaneseq
  %v1049 = vshrl.u32 %v1048, 7
  %v1050 = vsub.s32 6, %v1049
  %v1051 = vrot.slane %v377, %v1050
  %v1052 = vmul.f32 %v1051, %v303
  %v1053 = vmul.f32 %v1051, %v308
  %v1054 = vmul.f32 %v1051, %v313
  %v1055 = vmul.f32 %v1051, %v318
  %v1056 = vadd.f32 %v1044, %v1052
  %v1057 = vadd.f32 %v1045, %v1053
  %v1058 = vadd.f32 %v1046, %v1054
  %v1059 = vadd.f32 %v1047, %v1055
  %v1060 = vlaneseq
  %v1061 = vshrl.u32 %v1060, 7
  %v1062 = vsub.s32 7, %v1061
  %v1063 = vrot.slane %v377, %v1062
  %v1064 = vmul.f32 %v1063, %v323
  %v1065 = vmul.f32 %v1063, %v328
  %v1066 = vmul.f32 %v1063, %v333
  %v1067 = vmul.f32 %v1063, %v338
  %v1068 = vadd.f32 %v1056, %v1064
  %v1069 = vadd.f32 %v1057, %v1065
  %v1070 = vadd.f32 %v1058, %v1066
  %v1071 = vadd.f32 %v1059, %v1067
  %v1072 = vadd.f32 %v1068, %v348
  %v1073 = vadd.f32 %v1069, %v353
  %v1074 = vadd.f32 %v1070, %v358
  %v1075 = vadd.f32 %v1071, %v363
  %v1076 = vmax.f32 %v1072, 0.0
  %v1077 = vmax.f32 %v1073, 0.0
  %v1078 = vmax.f32 %v1074, 0.0
  %v1079 = vmax.f32 %v1075, 0.0
  %v1080 = vlaneseq
  %v1081 = vshrl.u32 %v1080, 7
  %v1082 = vsub.s32 0, %v1081
  %v1083 = vrot.slane %v379, %v1082
  %v1084 = vmul.f32 %v1083, %v183
  %v1085 = vmul.f32 %v1083, %v188
  %v1086 = vmul.f32 %v1083, %v193
  %v1087 = vmul.f32 %v1083, %v198
  %v1088 = vlaneseq
  %v1089 = vshrl.u32 %v1088, 7
  %v1090 = vsub.s32 1, %v1089
  %v1091 = vrot.slane %v379, %v1090
  %v1092 = vmul.f32 %v1091, %v203
  %v1093 = vmul.f32 %v1091, %v208
  %v1094 = vmul.f32 %v1091, %v213
  %v1095 = vmul.f32 %v1091, %v218
  %v1096 = vadd.f32 %v1084, %v1092
  %v1097 = vadd.f32 %v1085, %v1093
  %v1098 = vadd.f32 %v1086, %v1094
  %v1099 = vadd.f32 %v1087, %v1095
  %v1100 = vlaneseq
  %v1101 = vshrl.u32 %v1100, 7
  %v1102 = vsub.s32 2, %v1101
  %v1103 = vrot.slane %v379, %v1102
  %v1104 = vmul.f32 %v1103, %v223
  %v1105 = vmul.f32 %v1103, %v228
  %v1106 = vmul.f32 %v1103, %v233
  %v1107 = vmul.f32 %v1103, %v238
  %v1108 = vadd.f32 %v1096, %v1104
  %v1109 = vadd.f32 %v1097, %v1105
  %v1110 = vadd.f32 %v1098, %v1106
  %v1111 = vadd.f32 %v1099, %v1107
  %v1112 = vlaneseq
  %v1113 = vshrl.u32 %v1112, 7
  %v1114 = vsub.s32 3, %v1113
  %v1115 = vrot.slane %v379, %v1114
  %v1116 = vmul.f32 %v1115, %v243
  %v1117 = vmul.f32 %v1115, %v248
  %v1118 = vmul.f32 %v1115, %v253
  %v1119 = vmul.f32 %v1115, %v258
  %v1120 = vadd.f32 %v1108, %v1116
  %v1121 = vadd.f32 %v1109, %v1117
  %v1122 = vadd.f32 %v1110, %v1118
  %v1123 = vadd.f32 %v1111, %v1119
  %v1124 = vlaneseq
  %v1125 = vshrl.u32 %v1124, 7
  %v1126 = vsub.s32 4, %v1125
  %v1127 = vrot.slane %v379, %v1126
  %v1128 = vmul.f32 %v1127, %v263
  %v1129 = vmul.f32 %v1127, %v268
  %v1130 = vmul.f32 %v1127, %v273
  %v1131 = vmul.f32 %v1127, %v278
  %v1132 = vadd.f32 %v1120, %v1128
  %v1133 = vadd.f32 %v1121, %v1129
  %v1134 = vadd.f32 %v1122, %v1130
  %v1135 = vadd.f32 %v1123, %v1131
  %v1136 = vlaneseq
  %v1137 = vshrl.u32 %v1136, 7
  %v1138 = vsub.s32 5, %v1137
  %v1139 = vrot.slane %v379, %v1138
  %v1140 = vmul.f32 %v1139, %v283
  %v1141 = vmul.f32 %v1139, %v288
  %v1142 = vmul.f32 %v1139, %v293
  %v1143 = vmul.f32 %v1139, %v298
  %v1144 = vadd.f32 %v1132, %v1140
  %v1145 = vadd.f32 %v1133, %v1141
  %v1146 = vadd.f32 %v1134, %v1142
  %v1147 = vadd.f32 %v1135, %v1143
  %v1148 = vlaneseq
  %v1149 = vshrl.u32 %v1148, 7
  %v1150 = vsub.s32 6, %v1149
  %v1151 = vrot.slane %v379, %v1150
  %v1152 = vmul.f32 %v1151, %v303
  %v1153 = vmul.f32 %v1151, %v308
  %v1154 = vmul.f32 %v1151, %v313
  %v1155 = vmul.f32 %v1151, %v318
  %v1156 = vadd.f32 %v1144, %v1152
  %v1157 = vadd.f32 %v1145, %v1153
  %v1158 = vadd.f32 %v1146, %v1154
  %v1159 = vadd.f32 %v1147, %v1155
  %v1160 = vlaneseq
  %v1161 = vshrl.u32 %v1160, 7
  %v1162 = vsub.s32 7, %v1161
  %v1163 = vrot.slane %v379, %v1162
  %v1164 = vmul.f32 %v1163, %v323
  %v1165 = vmul.f32 %v1163, %v328
  %v1166 = vmul.f32 %v1163, %v333
  %v1167 = vmul.f32 %v1163, %v338
  %v1168 = vadd.f32 %v1156, %v1164
  %v1169 = vadd.f32 %v1157, %v1165
  %v1170 = vadd.f32 %v1158, %v1166
  %v1171 = vadd.f32 %v1159, %v1167
  %v1172 = vadd.f32 %v1168, %v348
  %v1173 = vadd.f32 %v1169, %v353
  %v1174 = vadd.f32 %v1170, %v358
  %v1175 = vadd.f32 %v1171, %v363
  %v1176 = vmax.f32 %v1172, 0.0
  %v1177 = vmax.f32 %v1173, 0.0
  %v1178 = vmax.f32 %v1174, 0.0
  %v1179 = vmax.f32 %v1175, 0.0
  %v1180 = vmul.f32 %v383, %v476
  %v1181 = vmul.f32 %v383, %v477
  %v1182 = vmul.f32 %v383, %v478
  %v1183 = vmul.f32 %v383, %v479
  %v1184 = vmul.f32 %v391, %v576
  %v1185 = vmul.f32 %v391, %v577
  %v1186 = vmul.f32 %v391, %v578
  %v1187 = vmul.f32 %v391, %v579
  %v1188 = vadd.f32 %v1180, %v1184
  %v1189 = vadd.f32 %v1181, %v1185
  %v1190 = vadd.f32 %v1182, %v1186
  %v1191 = vadd.f32 %v1183, %v1187
  %v1192 = vmul.f32 %v403, %v676
  %v1193 = vmul.f32 %v403, %v677
  %v1194 = vmul.f32 %v403, %v678
  %v1195 = vmul.f32 %v403, %v679
  %v1196 = vadd.f32 %v1188, %v1192
  %v1197 = vadd.f32 %v1189, %v1193
  %v1198 = vadd.f32 %v1190, %v1194
  %v1199 = vadd.f32 %v1191, %v1195
  %v1200 = vmul.f32 %v415, %v776
  %v1201 = vmul.f32 %v415, %v777
  %v1202 = vmul.f32 %v415, %v778
  %v1203 = vmul.f32 %v415, %v779
  %v1204 = vadd.f32 %v1196, %v1200
  %v1205 = vadd.f32 %v1197, %v1201
  %v1206 = vadd.f32 %v1198, %v1202
  %v1207 = vadd.f32 %v1199, %v1203
  %v1208 = vmul.f32 %v427, %v876
  %v1209 = vmul.f32 %v427, %v877
  %v1210 = vmul.f32 %v427, %v878
  %v1211 = vmul.f32 %v427, %v879
  %v1212 = vadd.f32 %v1204, %v1208
  %v1213 = vadd.f32 %v1205, %v1209
  %v1214 = vadd.f32 %v1206, %v1210
  %v1215 = vadd.f32 %v1207, %v1211
  %v1216 = vmul.f32 %v439, %v976
  %v1217 = vmul.f32 %v439, %v977
  %v1218 = vmul.f32 %v439, %v978
  %v1219 = vmul.f32 %v439, %v979
  %v1220 = vadd.f32 %v1212, %v1216
  %v1221 = vadd.f32 %v1213, %v1217
  %v1222 = vadd.f32 %v1214, %v1218
  %v1223 = vadd.f32 %v1215, %v1219
  %v1224 = vmul.f32 %v451, %v1076
  %v1225 = vmul.f32 %v451, %v1077
  %v1226 = vmul.f32 %v451, %v1078
  %v1227 = vmul.f32 %v451, %v1079
  %v1228 = vadd.f32 %v1220, %v1224
  %v1229 = vadd.f32 %v1221, %v1225
  %v1230 = vadd.f32 %v1222, %v1226
  %v1231 = vadd.f32 %v1223, %v1227
  %v1232 = vmul.f32 %v463, %v1176
  %v1233 = vmul.f32 %v463, %v1177
  %v1234 = vmul.f32 %v463, %v1178
  %v1235 = vmul.f32 %v463, %v1179
  %v1236 = vadd.f32 %v1228, %v1232
  %v1237 = vadd.f32 %v1229, %v1233
  %v1238 = vadd.f32 %v1230, %v1234
  %v1239 = vadd.f32 %v1231, %v1235
  %v1240 = vld [vmem:[%s3] sm:$0xff]
  %v1241 = vld [vmem:[%s3 + $0x8] sm:$0xff]
  %v1242 = vld [vmem:[%s3 + $0x10] sm:$0xff]
  %v1243 = vld [vmem:[%s3 + $0x18] sm:$0xff]
  %vm1244 = vcmask 261120
  %v1246 = vsel %vm1244, %v1240, 0
  %v1249 = vsel %vm1244, %v1241, 0
  %v1252 = vsel %vm1244, %v1242, 0
  %v1255 = vsel %vm1244, %v1243, 0
  %1257 = vmatprep.subr.mxu0 0.0
  %1258 = vmatpush1.msra.mxu0 %v1236
  %1259 = vmatprep.subr.mxu0 0.0
  %1260 = vmatpush1.msra.mxu0 %v1237
  %1261 = vmatprep.subr.mxu0 0.0
  %1262 = vmatpush1.msra.mxu0 %v1238
  %1263 = vmatprep.subr.mxu0 0.0
  %1264 = vmatpush1.msra.mxu0 %v1239
  %1265 = vmatprep.subr.mxu0 0.0
  %1266 = vmatpush1.msra.mxu0 0.0
  %1267 = vmatprep.subr.mxu0 0.0
  %1268 = vmatpush1.msra.mxu0 0.0
  %1269 = vmatprep.subr.mxu0 0.0
  %1270 = vmatpush1.msra.mxu0 0.0
  %1271 = vmatprep.subr.mxu0 0.0
  %1272 = vmatpush1.msra.mxu0 0.0
  %1273 = vmatprep.subr.mxu0 0.0
  %1274 = vmatpush1.msra.mxu0 0.0
  %1275 = vmatprep.subr.mxu0 0.0
  %1276 = vmatpush1.msra.mxu0 0.0
  %1277 = vmatprep.subr.mxu0 0.0
  %1278 = vmatpush1.msra.mxu0 0.0
  %1279 = vmatprep.subr.mxu0 0.0
  %1280 = vmatpush1.msra.mxu0 0.0
  %1281 = vmatprep.subr.mxu0 0.0
  %1282 = vmatpush1.msra.mxu0 0.0
  %1283 = vmatprep.subr.mxu0 0.0
  %1284 = vmatpush1.msra.mxu0 0.0
  %1285 = vmatprep.subr.mxu0 0.0
  %1286 = vmatpush1.msra.mxu0 0.0
  %1287 = vmatprep.subr.mxu0 0.0
  %1288 = vmatpush1.msra.mxu0 0.0
  %1289 = vmatprep.subr.mxu0 0.0
  %1290 = vmatpush1.msra.mxu0 0.0
  %1291 = vmatprep.subr.mxu0 0.0
  %1292 = vmatpush1.msra.mxu0 0.0
  %1293 = vmatprep.subr.mxu0 0.0
  %1294 = vmatpush1.msra.mxu0 0.0
  %1295 = vmatprep.subr.mxu0 0.0
  %1296 = vmatpush1.msra.mxu0 0.0
  %1297 = vmatprep.subr.mxu0 0.0
  %1298 = vmatpush1.msra.mxu0 0.0
  %1299 = vmatprep.subr.mxu0 0.0
  %1300 = vmatpush1.msra.mxu0 0.0
  %1301 = vmatprep.subr.mxu0 0.0
  %1302 = vmatpush1.msra.mxu0 0.0
  %1303 = vmatprep.subr.mxu0 0.0
  %1304 = vmatpush1.msra.mxu0 0.0
  %1305 = vmatprep.subr.mxu0 0.0
  %1306 = vmatpush1.msra.mxu0 0.0
  %1307 = vmatprep.subr.mxu0 0.0
  %1308 = vmatpush1.msra.mxu0 0.0
  %1309 = vmatprep.subr.mxu0 0.0
  %1310 = vmatpush1.msra.mxu0 0.0
  %1311 = vmatprep.subr.mxu0 0.0
  %1312 = vmatpush1.msra.mxu0 0.0
  %1313 = vmatprep.subr.mxu0 0.0
  %1314 = vmatpush1.msra.mxu0 0.0
  %1315 = vmatprep.subr.mxu0 0.0
  %1316 = vmatpush1.msra.mxu0 0.0
  %1317 = vmatprep.subr.mxu0 0.0
  %1318 = vmatpush1.msra.mxu0 0.0
  %1319 = vmatprep.subr.mxu0 0.0
  %1320 = vmatpush1.msra.mxu0 0.0
  %1321 = vmatprep.mubr.f32.mxu0 0.0
  %1322 = vmatmul.mubr.f32.gmra.mrb[0].mxu0 %v1246
  %v1323 = vpop.f32.mrb[0].mxu0
  %v1324 = vadd.f32 %v348, %v1323
  %v1325 = vpop.f32.mrb[0].mxu0
  %1326 = vmatprep.mubr.f32.mxu0 0.0
  %1327 = vmatmul.mubr.f32.gmra.mrb[0].mxu0 %v1249
  %v1328 = vpop.f32.mrb[0].mxu0
  %v1329 = vadd.f32 %v353, %v1328
  %v1330 = vpop.f32.mrb[0].mxu0
  %1331 = vmatprep.mubr.f32.mxu0 0.0
  %1332 = vmatmul.mubr.f32.gmra.mrb[0].mxu0 %v1252
  %v1333 = vpop.f32.mrb[0].mxu0
  %v1334 = vadd.f32 %v358, %v1333
  %v1335 = vpop.f32.mrb[0].mxu0
  %1336 = vmatprep.mubr.f32.mxu0 0.0
  %1337 = vmatmul.mubr.f32.gmra.mrb[0].mxu0 %v1255
  %v1338 = vpop.f32.mrb[0].mxu0
  %v1339 = vadd.f32 %v363, %v1338
  %v1340 = vpop.f32.mrb[0].mxu0
  %1341 = vdwg.mxu0
  %v1342 = vmax.f32 %v1324, 0.0
  %v1343 = vmax.f32 %v1329, 0.0
  %v1344 = vmax.f32 %v1334, 0.0
  %v1345 = vmax.f32 %v1339, 0.0
  %v1346 = vadd.f32 %v476, %v1342
  %v1347 = vadd.f32 %v477, %v1343
  %v1348 = vadd.f32 %v478, %v1344
  %v1349 = vadd.f32 %v479, %v1345
  %vm1350 = vcmask 162816
  %1351 = vst.msk [vmem:[%s5] sm:$0xff] %vm1350, %v1346
  %1352 = vst.msk [vmem:[%s5 + $0x8] sm:$0xff] %vm1350, %v1347
  %1353 = vst.msk [vmem:[%s5 + $0x10] sm:$0xff] %vm1350, %v1348
  %1354 = vst.msk [vmem:[%s5 + $0x18] sm:$0xff] %vm1350, %v1349
  // Predicated region
  $region22: #{gcn_forward.1} parent=0 // pred_check
    _
  $region23: #{gcn_forward.1} parent=0 // pred_check_branch
    %1356 = sbr.rel (0) target = $region25
  $region24: #{gcn_forward.1} parent=0 // pred_region
    _
  $region25: #{gcn_forward.1} parent=0 // pred_fallthru
    _
  // Predicated region
  $region26: #{gcn_forward.1} parent=0 // pred_check
    _
  $region27: #{gcn_forward.1} parent=0 // pred_check_branch
    %1358 = sbr.rel (0) target = $region29
  $region28: #{gcn_forward.1} parent=0 // pred_region
    _
  $region29: #{gcn_forward.1} parent=0 // pred_fallthru
    _

</llo_original>
